<compile_context>
chip_gen: v7x
topology: tpu7x:2x2x1
jax: 0.10.0
libtpu: 0.0.40
codegen_flags: <defaults>
</compile_context>

<pallas_src>
import functools

import numpy as np
import jax
import jax.numpy as jnp
from jax.experimental import pallas as pl
from jax.experimental.pallas import tpu as pltpu


# --------------------------------------------------------------------------
# VMEM sizing (review item: gate any explicit limit on the actual chip)
# --------------------------------------------------------------------------
_VMEM_CAPS = None


def _vmem_caps():
    """Returns (vmem_limit_bytes or None, tile-planning budget in bytes)."""
    global _VMEM_CAPS
    if _VMEM_CAPS is None:
        try:
            cap = int(pltpu.get_tpu_info().vmem_capacity_bytes)
            if cap < (32 << 20):
                raise ValueError("implausible VMEM capacity")
            # ~44.8 MiB on v7x (64 MiB physical), ~90 MiB on v5e/v6e (128 MiB).
            limit = min(cap * 7 // 10, 100 << 20)
            _VMEM_CAPS = (limit, max(limit * 6 // 10, 12 << 20))
        except Exception:
            # Conservative: stay under the 16 MiB default scoped limit (v5e).
            _VMEM_CAPS = (None, 12 << 20)
    return _VMEM_CAPS


def _compiler_params(n_grid):
    limit, _ = _vmem_caps()
    kwargs = dict(dimension_semantics=("parallel",) * n_grid)
    if limit is not None:
        kwargs["vmem_limit_bytes"] = int(limit)
    return pltpu.CompilerParams(**kwargs)


def _silu(y):
    # exp and reciprocal both land on the EUP slot (off the VALU critical path)
    return y * pl.reciprocal(1.0 + jnp.exp(-y), approx=True)


# --------------------------------------------------------------------------
# Kernel 1: fused GEMM  out = act(sum_i a_i @ w_i + bias) [+ residual]
#   - covers 1x1 convs, im2col'd stride-2 / stem convs, CSP conv3 (2 inputs,
#     fused concat), CSP shortcut residual and the head final conv.
#   - weights/bias use j-only (usually constant) block indices -> VMEM-resident
# --------------------------------------------------------------------------
@functools.lru_cache(maxsize=None)
def _build_gemm(n_in, Ks, Mp, N, TM, TN, apply_silu, has_res, out_dtype):
    Mtiles, Ntiles = Mp // TM, N // TN

    def kernel(*refs):
        a_refs = refs[:n_in]
        w_refs = refs[n_in:2 * n_in]
        b_ref = refs[2 * n_in]
        r_ref = refs[2 * n_in + 1] if has_res else None
        o_ref = refs[-1]
        acc = jnp.dot(a_refs[0][...], w_refs[0][...],
                      preferred_element_type=jnp.float32)
        for i in range(1, n_in):
            acc = acc + jnp.dot(a_refs[i][...], w_refs[i][...],
                                preferred_element_type=jnp.float32)
        y = acc + b_ref[...]
        if apply_silu:
            y = _silu(y)
        if has_res:
            y = y + r_ref[...].astype(jnp.float32)
        o_ref[...] = y.astype(o_ref.dtype)

    in_specs = [pl.BlockSpec((TM, K), lambda i, j: (i, 0)) for K in Ks]
    in_specs += [pl.BlockSpec((K, TN), lambda i, j: (0, j)) for K in Ks]
    in_specs += [pl.BlockSpec((1, TN), lambda i, j: (0, j))]
    if has_res:
        in_specs += [pl.BlockSpec((TM, TN), lambda i, j: (i, j))]

    return jax.jit(pl.pallas_call(
        kernel,
        out_shape=jax.ShapeDtypeStruct((Mp, N), out_dtype),
        grid_spec=pltpu.PrefetchScalarGridSpec(
            num_scalar_prefetch=0,
            grid=(Mtiles, Ntiles),
            in_specs=in_specs,
            out_specs=pl.BlockSpec((TM, TN), lambda i, j: (i, j)),
        ),
        compiler_params=_compiler_params(2),
    ))


def _plan_gemm(M, Ks, N, out_bytes, has_res, budget):
    """Pick (TM, Mtiles, TN, Ntiles) so the double-buffered working set fits."""
    Ktot = sum(Ks)

    def wbytes(tn):
        return 2 * (Ktot * tn * 2) + 2 * tn * 4

    TN = N
    while wbytes(TN) > budget // 2 and TN % 2 == 0 and TN // 2 >= 128:
        TN //= 2

    def mcost(tm):
        c = 2 * tm * Ktot * 2 + 2 * tm * TN * out_bytes
        if has_res:
            c += 2 * tm * TN * 2
        return c

    rem = max(budget - wbytes(TN), budget // 3)
    if M <= 256 or (M <= 1024 and mcost(M) <= rem):
        TM, Mtiles = M, 1
    else:
        cands = [d for d in range(8, min(M, 512) + 1, 8)
                 if M % d == 0 and mcost(d) <= rem]
        if cands:
            TM = max(cands)
        else:
            TM = 512
            while TM > 8 and mcost(TM) > rem:
                TM //= 2
        Mtiles = -(-M // TM)
    Ntiles = N // TN
    # v7x has two TensorCores: avoid a 1x1 grid when N can be split.
    if Mtiles * Ntiles == 1 and N % 256 == 0:
        TN, Ntiles = N // 2, 2
    return TM, Mtiles, TN, Ntiles


def fused_matmul(a_list, w_list, bias, residual=None, apply_silu=True,
                 out_dtype=jnp.bfloat16):
    M = int(a_list[0].shape[0])
    N = int(w_list[0].shape[1])
    Ks = tuple(int(a.shape[1]) for a in a_list)
    out_bytes = 2 if out_dtype == jnp.bfloat16 else 4
    _, budget = _vmem_caps()
    TM, Mtiles, TN, Ntiles = _plan_gemm(M, Ks, N, out_bytes,
                                        residual is not None, budget)
    Mp = TM * Mtiles
    if Mp != M:  # rare fallback; avoided by divisor-choosing TM above
        a_list = [jnp.pad(a, ((0, Mp - M), (0, 0))) for a in a_list]
        if residual is not None:
            residual = jnp.pad(residual, ((0, Mp - M), (0, 0)))
    call = _build_gemm(len(a_list), Ks, Mp, N, TM, TN, bool(apply_silu),
                       residual is not None, out_dtype)
    args = list(a_list) + list(w_list) + [bias]
    if residual is not None:
        args.append(residual)
    out = call(*args)
    return out[:M] if Mp != M else out


# --------------------------------------------------------------------------
# Kernel 2: direct 3x3 stride-1 conv (no im2col).  The padded NHWC activation
# is a constant per-image block; the 9 taps are sliced in-kernel.
# --------------------------------------------------------------------------
@functools.lru_cache(maxsize=None)
def _build_conv3s1(Nb, Ho, Wo, Hp, Wp, Cin, Cout, TRo, TN):
    bands = Ho // TRo
    Ntiles = Cout // TN

    def kernel(x_ref, w_ref, b_ref, o_ref):
        r0 = pl.program_id(1) * TRo
        acc = None
        for dy in range(3):
            slab = x_ref[pl.ds(r0 + dy, TRo), :, :]          # (TRo, Wp, Cin)
            for dx in range(3):
                a = slab[:, dx:dx + Wo, :].reshape(TRo * Wo, Cin)
                d = jnp.dot(a, w_ref[dy * 3 + dx],
                            preferred_element_type=jnp.float32)
                acc = d if acc is None else acc + d
        y = _silu(acc + b_ref[...])
        o_ref[...] = y.reshape(TRo, Wo, TN).astype(o_ref.dtype)

    return jax.jit(pl.pallas_call(
        kernel,
        out_shape=jax.ShapeDtypeStruct((Nb * Ho, Wo, Cout), jnp.bfloat16),
        grid_spec=pltpu.PrefetchScalarGridSpec(
            num_scalar_prefetch=0,
            grid=(Nb, bands, Ntiles),
            in_specs=[
                # whole padded image: constant across (band, j) -> fetched once
                pl.BlockSpec((Hp, Wp, Cin), lambda n, r, j: (n, 0, 0)),
                # VMEM-resident weight (tap, Cin, TN)
                pl.BlockSpec((9, Cin, TN), lambda n, r, j: (0, 0, j)),
                pl.BlockSpec((1, TN), lambda n, r, j: (0, j)),
            ],
            out_specs=pl.BlockSpec((TRo, Wo, TN),
                                   lambda n, r, j: (n * bands + r, 0, j)),
        ),
        compiler_params=_compiler_params(3),
    ))


def _plan_conv3(Ho, Wo, Hp, Wp, Cin, Cout, budget):
    TN = Cout
    while 2 * (9 * Cin * TN * 2) > budget // 2 and TN % 2 == 0 and TN // 2 >= 128:
        TN //= 2
    TRo = Ho
    if TRo * Wo > 1024 or TRo * Wp * Cin * 2 > (1 << 19):
        divs = [d for d in range(1, Ho + 1)
                if Ho % d == 0 and d * Wo <= 1024 and d * Wp * Cin * 2 <= (1 << 19)]
        TRo = max(divs) if divs else 1
    return TRo, TN


def conv3x3_s1(x, w, bias):
    """3x3 / stride-1 / pad-1 conv + folded BN + SiLU on NHWC bf16 input."""
    N, H, W, C = x.shape
    Cout = int(w.shape[-1])
    Hp, Wp = H + 2, W + 2
    xp = jnp.pad(x, ((0, 0), (1, 1), (1, 1), (0, 0))).reshape(N * Hp, Wp, C)
    _, budget = _vmem_caps()
    TRo, TN = _plan_conv3(H, W, Hp, Wp, C, Cout, budget)
    call = _build_conv3s1(N, H, W, Hp, Wp, C, Cout, TRo, TN)
    out = call(xp, w, bias)                                   # (N*H, W, Cout)
    return out.reshape(N, H, W, Cout)


# --------------------------------------------------------------------------
# Plain-JAX glue: im2col (stride-2 / stem only), nearest upsample
# --------------------------------------------------------------------------
def im2col(x, k, stride):
    """x: (N, H, W, C) bf16 -> patches (N*Ho*Wo, k*k*C), K ordered (dy, dx, c)."""
    N, H, W, C = x.shape
    pad = k // 2                         # matches the reference (k=6 -> pad=3)
    Ho = (H + 2 * pad - k) // stride + 1
    Wo = (W + 2 * pad - k) // stride + 1
    xp = jnp.pad(x, ((0, 0), (pad, pad), (pad, pad), (0, 0)))
    cols = []
    for dy in range(k):
        for dx in range(k):
            cols.append(xp[:, dy:dy + stride * Ho:stride,
                           dx:dx + stride * Wo:stride, :])
    patches = jnp.concatenate(cols, axis=-1)
    return patches.reshape(N * Ho * Wo, k * k * C), (N, Ho, Wo)


def upsample_nearest(x, size):
    """torch F.interpolate(mode='nearest', size=size) on NHWC."""
    N, H, W, C = x.shape
    Ht, Wt = size
    if Ht % H == 0 and Wt % W == 0:      # exact repeat: no gathers
        fh, fw = Ht // H, Wt // W
        y = jnp.broadcast_to(x[:, :, None, :, None, :], (N, H, fh, W, fw, C))
        return y.reshape(N, Ht, Wt, C)
    iy = (jnp.arange(Ht) * H) // Ht
    ix = (jnp.arange(Wt) * W) // Wt
    return x[:, iy][:, :, ix]


# --------------------------------------------------------------------------
# Parameter initialization (deterministic; BN folded, bf16 weights, (1,N) bias)
# --------------------------------------------------------------------------
def init_conv_block(key, cin, cout, k, stride):
    ks = jax.random.split(key, 5)
    fan_in = cin * k * k
    w = jax.random.normal(ks[0], (k * k * cin, cout), jnp.float32) / np.sqrt(fan_in)
    gamma = 1.0 + 0.1 * jax.random.normal(ks[1], (cout,), jnp.float32)
    beta = 0.1 * jax.random.normal(ks[2], (cout,), jnp.float32)
    mean = 0.1 * jax.random.normal(ks[3], (cout,), jnp.float32)
    var = 1.0 + 0.1 * jax.random.uniform(ks[4], (cout,), jnp.float32)
    scale = gamma / jnp.sqrt(var + 1e-5)
    bias = (beta - mean * scale).reshape(1, cout).astype(jnp.float32)
    wf = (w * scale[None, :]).astype(jnp.bfloat16)      # fold BN scale (once)
    if k == 3 and stride == 1:
        wf = wf.reshape(9, cin, cout)                   # layout for lazy kernel
    return dict(kind="conv", w=wf, b=bias, k=k, stride=stride,
                cin=cin, cout=cout)


def init_csp_block(key, cin, cout, num_blocks):
    mid = cout // 2
    keys = jax.random.split(key, 3 + num_blocks)
    c3 = init_conv_block(keys[2], 2 * mid, cout, 1, 1)
    return dict(
        kind="csp", shortcut=(cin == cout), cout=cout, mid=mid,
        conv1=init_conv_block(keys[0], cin, mid, 1, 1),
        conv2=init_conv_block(keys[1], cin, mid, 1, 1),
        blocks=[init_conv_block(keys[3 + n], mid, mid, 3, 1)
                for n in range(num_blocks)],
        # conv3 weight split into the two concat segments (fused-concat kernel)
        w3a=c3["w"][:mid], w3b=c3["w"][mid:], b3=c3["b"])


def init_head(key, cin, num_classes):
    k1, k2, k3, k4 = jax.random.split(key, 4)
    cmid = cin // 2
    cout = 3 * (num_classes + 5)
    w = jax.random.normal(k3, (cmid, cout), jnp.float32) / np.sqrt(cmid)
    b = (0.01 * jax.random.normal(k4, (cout,), jnp.float32)).reshape(1, cout)
    return dict(conv1=init_conv_block(k1, cin, cmid, 3, 1),
                conv2=init_conv_block(k2, cmid, cmid, 3, 1),
                final_w=w.astype(jnp.bfloat16),
                final_b=b.astype(jnp.float32),
                final_cout=cout)


def init_yolo(key, num_classes, input_shape):
    keys = jax.random.split(key, 32)
    ki = iter(keys)
    backbone = [
        init_conv_block(next(ki), 3, 32, 6, 2),
        init_conv_block(next(ki), 32, 64, 3, 2),
        init_csp_block(next(ki), 64, 128, 2),
        init_conv_block(next(ki), 128, 256, 3, 2),
        init_csp_block(next(ki), 256, 256, 3),
        init_conv_block(next(ki), 256, 512, 3, 2),
        init_csp_block(next(ki), 512, 512, 4),
        init_conv_block(next(ki), 512, 1024, 3, 2),
        init_csp_block(next(ki), 1024, 1024, 2),
    ]
    neck = dict(
        lateral_conv1=init_conv_block(next(ki), 1024, 512, 1, 1),
        lateral_conv2=init_conv_block(next(ki), 512, 256, 1, 1),
        downsample1=init_conv_block(next(ki), 256, 256, 3, 2),
        downsample2=init_conv_block(next(ki), 512, 512, 3, 2),
        fusion_conv1=init_csp_block(next(ki), 1024, 512, 1),
        fusion_conv2=init_csp_block(next(ki), 512, 256, 1),
        fusion_conv3=init_csp_block(next(ki), 512, 512, 1),
        fusion_conv4=init_csp_block(next(ki), 1024, 1024, 1),
    )
    heads = dict(
        large=init_head(next(ki), 256, num_classes),
        medium=init_head(next(ki), 512, num_classes),
        small=init_head(next(ki), 1024, num_classes),
    )
    return dict(backbone=backbone, neck=neck, heads=heads,
                input_shape=input_shape)


# --------------------------------------------------------------------------
# Forward pass (mirrors YOLO.forward; Dropout2d identity in eval)
# --------------------------------------------------------------------------
def apply_conv_block(p, x):
    N, H, W, C = x.shape
    if p["k"] == 1:
        out = fused_matmul([x.reshape(N * H * W, C)], [p["w"]], p["b"])
        return out.reshape(N, H, W, p["cout"])
    if p["k"] == 3 and p["stride"] == 1:
        return conv3x3_s1(x, p["w"], p["b"])
    patches, (N, Ho, Wo) = im2col(x, p["k"], p["stride"])
    out = fused_matmul([patches], [p["w"]], p["b"])
    return out.reshape(N, Ho, Wo, p["cout"])


def apply_csp(p, x):
    y1 = apply_conv_block(p["conv1"], x)
    y2 = apply_conv_block(p["conv2"], x)
    for bp in p["blocks"]:
        y2 = apply_conv_block(bp, y2)
    N, H, W, _ = y1.shape
    mid, cout = p["mid"], p["cout"]
    res = x.reshape(N * H * W, cout) if p["shortcut"] else None
    # fused concat (two K segments) + bias + SiLU + optional residual epilogue
    out = fused_matmul([y1.reshape(N * H * W, mid), y2.reshape(N * H * W, mid)],
                       [p["w3a"], p["w3b"]], p["b3"], residual=res)
    return out.reshape(N, H, W, cout)


def apply_layer(p, x):
    return apply_csp(p, x) if p["kind"] == "csp" else apply_conv_block(p, x)


def apply_head(p, x):
    x = apply_conv_block(p["conv1"], x)
    x = apply_conv_block(p["conv2"], x)
    N, H, W, C = x.shape
    out = fused_matmul([x.reshape(N * H * W, C)], [p["final_w"]], p["final_b"],
                       apply_silu=False, out_dtype=jnp.float32)
    return out.reshape(N, H, W, p["final_cout"])


def yolo_forward(params, x_nchw):
    # x_nchw: (N, 3, H, W), same convention as the PyTorch module.
    assert (x_nchw.shape[-2], x_nchw.shape[-1]) == params["input_shape"], \
        "feed inputs at input_shape (the bilinear-resize branch is then a no-op)"
    x = jnp.transpose(x_nchw, (0, 2, 3, 1)).astype(jnp.bfloat16)   # NHWC bf16

    features = []
    for i, layer in enumerate(params["backbone"]):
        x = apply_layer(layer, x)
        if i in (3, 5, 8):
            features.append(x)
    c3, c4, c5 = features

    neck = params["neck"]
    p5 = apply_conv_block(neck["lateral_conv1"], c5)
    p5_up = upsample_nearest(p5, c4.shape[1:3])
    p4 = apply_csp(neck["fusion_conv1"], jnp.concatenate([c4, p5_up], axis=-1))
    p4_lateral = apply_conv_block(neck["lateral_conv2"], p4)
    p4_up = upsample_nearest(p4_lateral, c3.shape[1:3])
    p3 = apply_csp(neck["fusion_conv2"], jnp.concatenate([c3, p4_up], axis=-1))
    p3_down = apply_conv_block(neck["downsample1"], p3)
    p4_enhanced = apply_csp(neck["fusion_conv3"],
                            jnp.concatenate([p4_lateral, p3_down], axis=-1))
    p4_down = apply_conv_block(neck["downsample2"], p4_enhanced)
    p5_enhanced = apply_csp(neck["fusion_conv4"],
                            jnp.concatenate([p5, p4_down], axis=-1))

    outs = [
        apply_head(params["heads"]["large"], p3),
        apply_head(params["heads"]["medium"], p4_enhanced),
        apply_head(params["heads"]["small"], p5_enhanced),
    ]
    # back to NCHW f32 to match the PyTorch output convention
    return [jnp.transpose(o, (0, 3, 1, 2)) for o in outs]


if __name__ == "__main__":
    num_classes = 4
    input_shape = (32, 32)            # small but structurally identical to (640, 640)
    key = jax.random.PRNGKey(0)
    pkey, xkey = jax.random.split(key)
    params = init_yolo(pkey, num_classes, input_shape)
    x = jax.random.normal(xkey, (2, 3, input_shape[0], input_shape[1]), jnp.float32)

    outs = yolo_forward(params, x)
    outs = jax.block_until_ready(outs)

    assert len(outs) == 3
    for o in outs:
        assert o.shape[0] == 2 and o.shape[1] == 3 * (num_classes + 5)
        assert o.dtype == jnp.float32
        assert bool(jnp.all(jnp.isfinite(o)))
    print("KERNEL_OK")
</pallas_src>

<mosaic_0001>
module attributes {stable_mosaic.version = 11 : i64} {
  func.func @kernel(%arg0: i32, %arg1: i32, %arg2: memref<578x108xbf16, #tpu.memory_space<vmem>>, %arg3: memref<108x32xbf16, #tpu.memory_space<vmem>>, %arg4: memref<1x32xf32, #tpu.memory_space<vmem>>, %arg5: memref<578x32xbf16, #tpu.memory_space<vmem>>) attributes {dimension_semantics = [#tpu.dimension_semantics<parallel>, #tpu.dimension_semantics<parallel>], iteration_bounds = array<i64: 1, 1>, scalar_prefetch = 0 : i64, scratch_operands = 0 : i64, tpu.core_type = #tpu.core_type<tc>, window_params = [{transform_indices = @transform_0, window_bounds = array<i64: 578, 108>}, {transform_indices = @transform_1, window_bounds = array<i64: 108, 32>}, {transform_indices = @transform_2, window_bounds = array<i64: 1, 32>}, {transform_indices = @transform_3, window_bounds = array<i64: 578, 32>}]} {
    %c0 = arith.constant 0 : index
    %c0_0 = arith.constant 0 : index
    %0 = vector.load %arg2[%c0, %c0_0] : memref<578x108xbf16, #tpu.memory_space<vmem>>, vector<578x108xbf16>
    %c0_1 = arith.constant 0 : index
    %c0_2 = arith.constant 0 : index
    %1 = vector.load %arg3[%c0_1, %c0_2] : memref<108x32xbf16, #tpu.memory_space<vmem>>, vector<108x32xbf16>
    %cst = arith.constant dense<0.000000e+00> : vector<578x32xf32>
    %2 = tpu.matmul %0, %1, %cst {dimension_numbers = #tpu.dot_dimension_numbers<[1], [0], [0], [1], [0, 0, 1, 1], [], []>} : vector<578x108xbf16>, vector<108x32xbf16>, vector<578x32xf32> -> vector<578x32xf32>
    %c0_3 = arith.constant 0 : index
    %c0_4 = arith.constant 0 : index
    %3 = vector.load %arg4[%c0_3, %c0_4] : memref<1x32xf32, #tpu.memory_space<vmem>>, vector<1x32xf32>
    %4 = vector.broadcast %3 : vector<1x32xf32> to vector<578x32xf32>
    %5 = arith.addf %2, %4 : vector<578x32xf32>
    %cst_5 = arith.constant 0.000000e+00 : f32
    %6 = vector.broadcast %cst_5 : f32 to vector<578x32xf32>
    %7 = arith.subf %6, %5 : vector<578x32xf32>
    %8 = math.exp %7 : vector<578x32xf32>
    %cst_6 = arith.constant 1.000000e+00 : f32
    %9 = vector.broadcast %cst_6 : f32 to vector<578x32xf32>
    %10 = arith.addf %9, %8 : vector<578x32xf32>
    %11 = tpu.reciprocal %10 {approx = true} : vector<578x32xf32> -> vector<578x32xf32>
    %12 = arith.mulf %5, %11 : vector<578x32xf32>
    %13 = arith.truncf %12 : vector<578x32xf32> to vector<578x32xbf16>
    %c0_7 = arith.constant 0 : index
    %c0_8 = arith.constant 0 : index
    %14 = vector.load %arg5[%c0_7, %c0_8] : memref<578x32xbf16, #tpu.memory_space<vmem>>, vector<578x32xbf16>
    tpu.vector_store %arg5[%c0_7, %c0_8], %13 {strides = array<i32>} : memref<578x32xbf16, #tpu.memory_space<vmem>>, vector<578x32xbf16>,
    return
  }
  func.func @transform_0(%arg0: i32, %arg1: i32) -> (i32, i32) {
    %c0_i32 = arith.constant 0 : i32
    %c0_i32_0 = arith.constant 0 : i32
    return %arg0, %c0_i32 : i32, i32
  }
  func.func @transform_1(%arg0: i32, %arg1: i32) -> (i32, i32) {
    %c0_i32 = arith.constant 0 : i32
    %c0_i32_0 = arith.constant 0 : i32
    return %c0_i32, %arg1 : i32, i32
  }
  func.func @transform_2(%arg0: i32, %arg1: i32) -> (i32, i32) {
    %c0_i32 = arith.constant 0 : i32
    %c0_i32_0 = arith.constant 0 : i32
    return %c0_i32, %arg1 : i32, i32
  }
  func.func @transform_3(%arg0: i32, %arg1: i32) -> (i32, i32) {
    %c0_i32 = arith.constant 0 : i32
    return %arg0, %arg1 : i32, i32
  }
}

</mosaic_0001>

<llo_original>
// kernel: tpu_custom_call.1
$region0: #{tpu_custom_call.1}
  #allocation0 [shape = 'u32[]', space=smem, size = 0x4, offset = 0x4, fixed_abs, tag = 'smem constant byte address 0x4 - core index']
  #allocation1 [shape = 'u32[144,128]{1,0:T(1,128)}', space=vmem, size = 0x12000, scoped, tag = 'internal scratch']
  %s0 = inlined_call_operand.vmem [shape: bf16[578,108], index: 0, kind: input, shape index: {}]
  %s1 = inlined_call_operand.vmem [shape: bf16[108,32], index: 1, kind: input, shape index: {}]
  %s2 = inlined_call_operand.vmem [shape: f32[1,32], index: 2, kind: input, shape index: {}]
  %s3 = inlined_call_operand.vmem [shape: bf16[578,32], index: 3, kind: output, shape index: {}]
  %s4 = sld [smem:[#allocation0]]
  $region22: #{tpu_custom_call.1} parent=0
    _
  %s6 = ssub.s32 1, %s4
  %s7 = scalar_select 0, %s6, %s4
  // Predicated region
  $region2: #{tpu_custom_call.1} parent=0 // pred_check
    _
  $region3: #{tpu_custom_call.1} parent=0 // pred_check_branch
    %9 = sbr.rel (0) target = $region5
  $region4: #{tpu_custom_call.1} parent=0 // pred_region
    _
  $region5: #{tpu_custom_call.1} parent=0 // pred_fallthru
    _
  // Predicated region
  $region6: #{tpu_custom_call.1} parent=0 // pred_check
    _
  $region7: #{tpu_custom_call.1} parent=0 // pred_check_branch
    %11 = sbr.rel (0) target = $region9
  $region8: #{tpu_custom_call.1} parent=0 // pred_region
    _
  $region9: #{tpu_custom_call.1} parent=0 // pred_fallthru
    _
  // Predicated region
  $region10: #{tpu_custom_call.1} parent=0 // pred_check
    _
  $region11: #{tpu_custom_call.1} parent=0 // pred_check_branch
    %13 = sbr.rel (0) target = $region13
  $region12: #{tpu_custom_call.1} parent=0 // pred_region
    _
  $region13: #{tpu_custom_call.1} parent=0 // pred_fallthru
    _
  %v15 = vld [vmem:[%s0] sm:$0xf]
  %v16 = vld [vmem:[%s0 + $0x4] sm:$0xf]
  %v17 = vld [vmem:[%s0 + $0x8] sm:$0xf]
  %v18 = vld [vmem:[%s0 + $0xc] sm:$0xf]
  %v19 = vld [vmem:[%s0 + $0x10] sm:$0xf]
  %v20 = vld [vmem:[%s0 + $0x14] sm:$0xf]
  %v21 = vld [vmem:[%s0 + $0x18] sm:$0xf]
  %v22 = vld [vmem:[%s0 + $0x1c] sm:$0xf]
  %v23 = vld [vmem:[%s0 + $0x20] sm:$0xf]
  %v24 = vld [vmem:[%s0 + $0x24] sm:$0xf]
  %v25 = vld [vmem:[%s0 + $0x28] sm:$0xf]
  %v26 = vld [vmem:[%s0 + $0x2c] sm:$0xf]
  %v27 = vld [vmem:[%s0 + $0x30] sm:$0xf]
  %v28 = vld [vmem:[%s0 + $0x34] sm:$0xf]
  %v29 = vld [vmem:[%s0 + $0x38] sm:$0xf]
  %v30 = vld [vmem:[%s0 + $0x3c] sm:$0xf]
  %v31 = vld [vmem:[%s0 + $0x40] sm:$0xf]
  %v32 = vld [vmem:[%s0 + $0x44] sm:$0xf]
  %v33 = vld [vmem:[%s0 + $0x48] sm:$0xf]
  %v34 = vld [vmem:[%s0 + $0x4c] sm:$0xf]
  %v35 = vld [vmem:[%s0 + $0x50] sm:$0xf]
  %v36 = vld [vmem:[%s0 + $0x54] sm:$0xf]
  %v37 = vld [vmem:[%s0 + $0x58] sm:$0xf]
  %v38 = vld [vmem:[%s0 + $0x5c] sm:$0xf]
  %v39 = vld [vmem:[%s0 + $0x60] sm:$0xf]
  %v40 = vld [vmem:[%s0 + $0x64] sm:$0xf]
  %v41 = vld [vmem:[%s0 + $0x68] sm:$0xf]
  %v42 = vld [vmem:[%s0 + $0x6c] sm:$0xf]
  %v43 = vld [vmem:[%s0 + $0x70] sm:$0xf]
  %v44 = vld [vmem:[%s0 + $0x74] sm:$0xf]
  %v45 = vld [vmem:[%s0 + $0x78] sm:$0xf]
  %v46 = vld [vmem:[%s0 + $0x7c] sm:$0xf]
  %v47 = vld [vmem:[%s0 + $0x80] sm:$0xf]
  %v48 = vld [vmem:[%s0 + $0x84] sm:$0xf]
  %v49 = vld [vmem:[%s0 + $0x88] sm:$0xf]
  %v50 = vld [vmem:[%s0 + $0x8c] sm:$0xf]
  %v51 = vld [vmem:[%s0 + $0x90] sm:$0xf]
  %v52 = vld [vmem:[%s0 + $0x94] sm:$0xf]
  %v53 = vld [vmem:[%s0 + $0x98] sm:$0xf]
  %v54 = vld [vmem:[%s0 + $0x9c] sm:$0xf]
  %v55 = vld [vmem:[%s0 + $0xa0] sm:$0xf]
  %v56 = vld [vmem:[%s0 + $0xa4] sm:$0xf]
  %v57 = vld [vmem:[%s0 + $0xa8] sm:$0xf]
  %v58 = vld [vmem:[%s0 + $0xac] sm:$0xf]
  %v59 = vld [vmem:[%s0 + $0xb0] sm:$0xf]
  %v60 = vld [vmem:[%s0 + $0xb4] sm:$0xf]
  %v61 = vld [vmem:[%s0 + $0xb8] sm:$0xf]
  %v62 = vld [vmem:[%s0 + $0xbc] sm:$0xf]
  %v63 = vld [vmem:[%s0 + $0xc0] sm:$0xf]
  %v64 = vld [vmem:[%s0 + $0xc4] sm:$0xf]
  %v65 = vld [vmem:[%s0 + $0xc8] sm:$0xf]
  %v66 = vld [vmem:[%s0 + $0xcc] sm:$0xf]
  %v67 = vld [vmem:[%s0 + $0xd0] sm:$0xf]
  %v68 = vld [vmem:[%s0 + $0xd4] sm:$0xf]
  %v69 = vld [vmem:[%s0 + $0xd8] sm:$0xf]
  %v70 = vld [vmem:[%s0 + $0xdc] sm:$0xf]
  %v71 = vld [vmem:[%s0 + $0xe0] sm:$0xf]
  %v72 = vld [vmem:[%s0 + $0xe4] sm:$0xf]
  %v73 = vld [vmem:[%s0 + $0xe8] sm:$0xf]
  %v74 = vld [vmem:[%s0 + $0xec] sm:$0xf]
  %v75 = vld [vmem:[%s0 + $0xf0] sm:$0xf]
  %v76 = vld [vmem:[%s0 + $0xf4] sm:$0xf]
  %v77 = vld [vmem:[%s0 + $0xf8] sm:$0xf]
  %v78 = vld [vmem:[%s0 + $0xfc] sm:$0xf]
  %v79 = vld [vmem:[%s0 + $0x100] sm:$0xf]
  %v80 = vld [vmem:[%s0 + $0x104] sm:$0xf]
  %v81 = vld [vmem:[%s0 + $0x108] sm:$0xf]
  %v82 = vld [vmem:[%s0 + $0x10c] sm:$0xf]
  %v83 = vld [vmem:[%s0 + $0x110] sm:$0xf]
  %v84 = vld [vmem:[%s0 + $0x114] sm:$0xf]
  %v85 = vld [vmem:[%s0 + $0x118] sm:$0xf]
  %v86 = vld [vmem:[%s0 + $0x11c] sm:$0xf]
  %v87 = vld [vmem:[%s0 + $0x120] sm:$0x1]
  %v88 = vld [vmem:[%s1] sm:$0xf]
  %v89 = vld [vmem:[%s1 + $0x4] sm:$0xf]
  %v90 = vld [vmem:[%s1 + $0x8] sm:$0xf]
  %v91 = vld [vmem:[%s1 + $0xc] sm:$0xf]
  %v92 = vld [vmem:[%s1 + $0x10] sm:$0xf]
  %v93 = vld [vmem:[%s1 + $0x14] sm:$0xf]
  %v94 = vld [vmem:[%s1 + $0x18] sm:$0xf]
  %v95 = vld [vmem:[%s1 + $0x1c] sm:$0xf]
  %v96 = vld [vmem:[%s1 + $0x20] sm:$0xf]
  %v97 = vld [vmem:[%s1 + $0x24] sm:$0xf]
  %v98 = vld [vmem:[%s1 + $0x28] sm:$0xf]
  %v99 = vld [vmem:[%s1 + $0x2c] sm:$0xf]
  %v100 = vld [vmem:[%s1 + $0x30] sm:$0xf]
  %v101 = vld [vmem:[%s1 + $0x34] sm:$0x3]
  %v102 = vld [vmem:[%s2] sm:$0x1]
  %v104 = vlaneseq
  %v105 = vshrl.u32 %v104, 7
  %v106 = vsub.s32 0, %v105
  %v107 = vrot.slane %v102, %v106
  %v182 = vunpack.c.l.b16 %v15
  %v183 = vunpack.c.l.b16 %v16
  %v184 = vunpack.c.l.b16 %v17
  %v185 = vunpack.c.l.b16 %v18
  %v186 = vunpack.c.l.b16 %v19
  %v187 = vunpack.c.l.b16 %v20
  %v188 = vunpack.c.l.b16 %v21
  %v189 = vunpack.c.l.b16 %v22
  %v190 = vunpack.c.l.b16 %v23
  %v191 = vunpack.c.l.b16 %v24
  %v192 = vunpack.c.l.b16 %v25
  %v193 = vunpack.c.l.b16 %v26
  %v194 = vunpack.c.l.b16 %v27
  %v195 = vunpack.c.l.b16 %v28
  %v196 = vunpack.c.l.b16 %v29
  %v197 = vunpack.c.l.b16 %v30
  %v198 = vunpack.c.l.b16 %v31
  %v199 = vunpack.c.l.b16 %v32
  %v200 = vunpack.c.l.b16 %v33
  %v201 = vunpack.c.l.b16 %v34
  %v202 = vunpack.c.l.b16 %v35
  %v203 = vunpack.c.l.b16 %v36
  %v204 = vunpack.c.l.b16 %v37
  %v205 = vunpack.c.l.b16 %v38
  %v206 = vunpack.c.l.b16 %v39
  %v207 = vunpack.c.l.b16 %v40
  %v208 = vunpack.c.l.b16 %v41
  %v209 = vunpack.c.l.b16 %v42
  %v210 = vunpack.c.l.b16 %v43
  %v211 = vunpack.c.l.b16 %v44
  %v212 = vunpack.c.l.b16 %v45
  %v213 = vunpack.c.l.b16 %v46
  %v214 = vunpack.c.l.b16 %v47
  %v215 = vunpack.c.l.b16 %v48
  %v216 = vunpack.c.l.b16 %v49
  %v217 = vunpack.c.l.b16 %v50
  %v218 = vunpack.c.l.b16 %v51
  %v219 = vunpack.c.l.b16 %v52
  %v220 = vunpack.c.l.b16 %v53
  %v221 = vunpack.c.l.b16 %v54
  %v222 = vunpack.c.l.b16 %v55
  %v223 = vunpack.c.l.b16 %v56
  %v224 = vunpack.c.l.b16 %v57
  %v225 = vunpack.c.l.b16 %v58
  %v226 = vunpack.c.l.b16 %v59
  %v227 = vunpack.c.l.b16 %v60
  %v228 = vunpack.c.l.b16 %v61
  %v229 = vunpack.c.l.b16 %v62
  %v230 = vunpack.c.l.b16 %v63
  %v231 = vunpack.c.l.b16 %v64
  %v232 = vunpack.c.l.b16 %v65
  %v233 = vunpack.c.l.b16 %v66
  %v234 = vunpack.c.l.b16 %v67
  %v235 = vunpack.c.l.b16 %v68
  %v236 = vunpack.c.l.b16 %v69
  %v237 = vunpack.c.l.b16 %v70
  %v238 = vunpack.c.l.b16 %v71
  %v239 = vunpack.c.l.b16 %v72
  %v240 = vunpack.c.l.b16 %v73
  %v241 = vunpack.c.l.b16 %v74
  %v242 = vunpack.c.l.b16 %v75
  %v243 = vunpack.c.l.b16 %v76
  %v244 = vunpack.c.l.b16 %v77
  %v245 = vunpack.c.l.b16 %v78
  %v246 = vunpack.c.l.b16 %v79
  %v247 = vunpack.c.l.b16 %v80
  %v248 = vunpack.c.l.b16 %v81
  %v249 = vunpack.c.l.b16 %v82
  %v250 = vunpack.c.l.b16 %v83
  %v251 = vunpack.c.l.b16 %v84
  %v252 = vunpack.c.l.b16 %v85
  %v253 = vunpack.c.l.b16 %v86
  %v254 = vunpack.c.l.b16 %v87
  %v255 = vpack.c.b16 %v183, %v182
  %v256 = vpack.c.b16 %v185, %v184
  %v257 = vpack.c.b16 %v187, %v186
  %v258 = vpack.c.b16 %v189, %v188
  %v259 = vpack.c.b16 %v191, %v190
  %v260 = vpack.c.b16 %v193, %v192
  %v261 = vpack.c.b16 %v195, %v194
  %v262 = vpack.c.b16 %v197, %v196
  %v263 = vpack.c.b16 %v199, %v198
  %v264 = vpack.c.b16 %v201, %v200
  %v265 = vpack.c.b16 %v203, %v202
  %v266 = vpack.c.b16 %v205, %v204
  %v267 = vpack.c.b16 %v207, %v206
  %v268 = vpack.c.b16 %v209, %v208
  %v269 = vpack.c.b16 %v211, %v210
  %v270 = vpack.c.b16 %v213, %v212
  %v271 = vpack.c.b16 %v215, %v214
  %v272 = vpack.c.b16 %v217, %v216
  %v273 = vpack.c.b16 %v219, %v218
  %v274 = vpack.c.b16 %v221, %v220
  %v275 = vpack.c.b16 %v223, %v222
  %v276 = vpack.c.b16 %v225, %v224
  %v277 = vpack.c.b16 %v227, %v226
  %v278 = vpack.c.b16 %v229, %v228
  %v279 = vpack.c.b16 %v231, %v230
  %v280 = vpack.c.b16 %v233, %v232
  %v281 = vpack.c.b16 %v235, %v234
  %v282 = vpack.c.b16 %v237, %v236
  %v283 = vpack.c.b16 %v239, %v238
  %v284 = vpack.c.b16 %v241, %v240
  %v285 = vpack.c.b16 %v243, %v242
  %v286 = vpack.c.b16 %v245, %v244
  %v287 = vpack.c.b16 %v247, %v246
  %v288 = vpack.c.b16 %v249, %v248
  %v289 = vpack.c.b16 %v251, %v250
  %v290 = vpack.c.b16 %v253, %v252
  %v291 = vpack.c.b16 %v254, %v254
  %v306 = vunpack.c.l.b16 %v88
  %v307 = vunpack.c.l.b16 %v89
  %v308 = vunpack.c.l.b16 %v90
  %v309 = vunpack.c.l.b16 %v91
  %v310 = vunpack.c.l.b16 %v92
  %v311 = vunpack.c.l.b16 %v93
  %v312 = vunpack.c.l.b16 %v94
  %v313 = vunpack.c.l.b16 %v95
  %v314 = vunpack.c.l.b16 %v96
  %v315 = vunpack.c.l.b16 %v97
  %v316 = vunpack.c.l.b16 %v98
  %v317 = vunpack.c.l.b16 %v99
  %v318 = vunpack.c.l.b16 %v100
  %v319 = vunpack.c.l.b16 %v101
  %v320 = vpack.c.b16 %v307, %v306
  %v321 = vpack.c.b16 %v309, %v308
  %v322 = vpack.c.b16 %v311, %v310
  %v323 = vpack.c.b16 %v313, %v312
  %v324 = vpack.c.b16 %v315, %v314
  %v325 = vpack.c.b16 %v317, %v316
  %v326 = vpack.c.b16 %v319, %v318
  %vm333 = vcmask 883712
  %v335 = vsel %vm333, %v255, 0
  %v338 = vsel %vm333, %v256, 0
  %v341 = vsel %vm333, %v257, 0
  %v344 = vsel %vm333, %v258, 0
  %v347 = vsel %vm333, %v259, 0
  %v350 = vsel %vm333, %v260, 0
  %v353 = vsel %vm333, %v261, 0
  %v356 = vsel %vm333, %v262, 0
  %v359 = vsel %vm333, %v263, 0
  %v362 = vsel %vm333, %v264, 0
  %v365 = vsel %vm333, %v265, 0
  %v368 = vsel %vm333, %v266, 0
  %v371 = vsel %vm333, %v267, 0
  %v374 = vsel %vm333, %v268, 0
  %v377 = vsel %vm333, %v269, 0
  %v380 = vsel %vm333, %v270, 0
  %v383 = vsel %vm333, %v271, 0
  %v386 = vsel %vm333, %v272, 0
  %v389 = vsel %vm333, %v273, 0
  %v392 = vsel %vm333, %v274, 0
  %v395 = vsel %vm333, %v275, 0
  %v398 = vsel %vm333, %v276, 0
  %v401 = vsel %vm333, %v277, 0
  %v404 = vsel %vm333, %v278, 0
  %v407 = vsel %vm333, %v279, 0
  %v410 = vsel %vm333, %v280, 0
  %v413 = vsel %vm333, %v281, 0
  %v416 = vsel %vm333, %v282, 0
  %v419 = vsel %vm333, %v283, 0
  %v422 = vsel %vm333, %v284, 0
  %v425 = vsel %vm333, %v285, 0
  %v428 = vsel %vm333, %v286, 0
  %v431 = vsel %vm333, %v287, 0
  %v434 = vsel %vm333, %v288, 0
  %v437 = vsel %vm333, %v289, 0
  %v440 = vsel %vm333, %v290, 0
  %v443 = vsel %vm333, %v291, 0
  %vm445 = vcmask 1045504
  %v447 = vsel %vm445, %v326, 0
  %449 = vmatprep.subr.bf16.mxu0 0
  %450 = vmatpush1.bf16.msra.mxu0 %v320
  %451 = vmatprep.subr.bf16.mxu0 0
  %452 = vmatpush1.bf16.msra.mxu0 %v321
  %453 = vmatprep.subr.bf16.mxu0 0
  %454 = vmatpush1.bf16.msra.mxu0 %v322
  %455 = vmatprep.subr.bf16.mxu0 0
  %456 = vmatpush1.bf16.msra.mxu0 %v323
  %457 = vmatprep.subr.bf16.mxu0 0
  %458 = vmatpush1.bf16.msra.mxu0 %v324
  %459 = vmatprep.subr.bf16.mxu0 0
  %460 = vmatpush1.bf16.msra.mxu0 %v325
  %461 = vmatprep.subr.bf16.mxu0 0
  %462 = vmatpush1.bf16.msra.mxu0 %v447
  %463 = vmatprep.subr.bf16.mxu0 0
  %464 = vmatpush1.bf16.msra.mxu0 0
  %465 = vmatprep.subr.bf16.mxu0 0
  %466 = vmatpush1.bf16.msra.mxu0 0
  %467 = vmatprep.subr.bf16.mxu0 0
  %468 = vmatpush1.bf16.msra.mxu0 0
  %469 = vmatprep.subr.bf16.mxu0 0
  %470 = vmatpush1.bf16.msra.mxu0 0
  %471 = vmatprep.subr.bf16.mxu0 0
  %472 = vmatpush1.bf16.msra.mxu0 0
  %473 = vmatprep.subr.bf16.mxu0 0
  %474 = vmatpush1.bf16.msra.mxu0 0
  %475 = vmatprep.subr.bf16.mxu0 0
  %476 = vmatpush1.bf16.msra.mxu0 0
  %477 = vmatprep.subr.bf16.mxu0 0
  %478 = vmatpush1.bf16.msra.mxu0 0
  %479 = vmatprep.subr.bf16.mxu0 0
  %480 = vmatpush1.bf16.msra.mxu0 0
  %481 = vmatprep.mubr.bf16.mxu0 0
  %482 = vmatmul.mubr.bf16.gmra.mrb[0].mxu0 %v335
  %v483 = vpop.f32.mrb[0].mxu0
  %v484 = vadd.f32 %v107, %v483
  %v485 = vpop.f32.mrb[0].mxu0
  %v486 = vpop.f32.mrb[0].mxu0
  %v487 = vadd.f32 %v107, %v486
  %v488 = vpop.f32.mrb[0].mxu0
  %489 = vmatprep.mubr.bf16.mxu0 0
  %490 = vmatmul.mubr.bf16.gmra.mrb[0].mxu0 %v338
  %v491 = vpop.f32.mrb[0].mxu0
  %v492 = vadd.f32 %v107, %v491
  %v493 = vpop.f32.mrb[0].mxu0
  %v494 = vpop.f32.mrb[0].mxu0
  %v495 = vadd.f32 %v107, %v494
  %v496 = vpop.f32.mrb[0].mxu0
  %497 = vmatprep.mubr.bf16.mxu0 0
  %498 = vmatmul.mubr.bf16.gmra.mrb[0].mxu0 %v341
  %v499 = vpop.f32.mrb[0].mxu0
  %v500 = vadd.f32 %v107, %v499
  %v501 = vpop.f32.mrb[0].mxu0
  %v502 = vpop.f32.mrb[0].mxu0
  %v503 = vadd.f32 %v107, %v502
  %v504 = vpop.f32.mrb[0].mxu0
  %505 = vmatprep.mubr.bf16.mxu0 0
  %506 = vmatmul.mubr.bf16.gmra.mrb[0].mxu0 %v344
  %v507 = vpop.f32.mrb[0].mxu0
  %v508 = vadd.f32 %v107, %v507
  %v509 = vpop.f32.mrb[0].mxu0
  %v510 = vpop.f32.mrb[0].mxu0
  %v511 = vadd.f32 %v107, %v510
  %v512 = vpop.f32.mrb[0].mxu0
  %513 = vmatprep.mubr.bf16.mxu0 0
  %514 = vmatmul.mubr.bf16.gmra.mrb[0].mxu0 %v347
  %v515 = vpop.f32.mrb[0].mxu0
  %v516 = vadd.f32 %v107, %v515
  %v517 = vpop.f32.mrb[0].mxu0
  %v518 = vpop.f32.mrb[0].mxu0
  %v519 = vadd.f32 %v107, %v518
  %v520 = vpop.f32.mrb[0].mxu0
  %521 = vmatprep.mubr.bf16.mxu0 0
  %522 = vmatmul.mubr.bf16.gmra.mrb[0].mxu0 %v350
  %v523 = vpop.f32.mrb[0].mxu0
  %v524 = vadd.f32 %v107, %v523
  %v525 = vpop.f32.mrb[0].mxu0
  %v526 = vpop.f32.mrb[0].mxu0
  %v527 = vadd.f32 %v107, %v526
  %v528 = vpop.f32.mrb[0].mxu0
  %529 = vmatprep.mubr.bf16.mxu0 0
  %530 = vmatmul.mubr.bf16.gmra.mrb[0].mxu0 %v353
  %v531 = vpop.f32.mrb[0].mxu0
  %v532 = vadd.f32 %v107, %v531
  %v533 = vpop.f32.mrb[0].mxu0
  %v534 = vpop.f32.mrb[0].mxu0
  %v535 = vadd.f32 %v107, %v534
  %v536 = vpop.f32.mrb[0].mxu0
  %537 = vmatprep.mubr.bf16.mxu0 0
  %538 = vmatmul.mubr.bf16.gmra.mrb[0].mxu0 %v356
  %v539 = vpop.f32.mrb[0].mxu0
  %v540 = vadd.f32 %v107, %v539
  %v541 = vpop.f32.mrb[0].mxu0
  %v542 = vpop.f32.mrb[0].mxu0
  %v543 = vadd.f32 %v107, %v542
  %v544 = vpop.f32.mrb[0].mxu0
  %545 = vmatprep.mubr.bf16.mxu0 0
  %546 = vmatmul.mubr.bf16.gmra.mrb[0].mxu0 %v359
  %v547 = vpop.f32.mrb[0].mxu0
  %v548 = vadd.f32 %v107, %v547
  %v549 = vpop.f32.mrb[0].mxu0
  %v550 = vpop.f32.mrb[0].mxu0
  %v551 = vadd.f32 %v107, %v550
  %v552 = vpop.f32.mrb[0].mxu0
  %553 = vmatprep.mubr.bf16.mxu0 0
  %554 = vmatmul.mubr.bf16.gmra.mrb[0].mxu0 %v362
  %v555 = vpop.f32.mrb[0].mxu0
  %v556 = vadd.f32 %v107, %v555
  %v557 = vpop.f32.mrb[0].mxu0
  %v558 = vpop.f32.mrb[0].mxu0
  %v559 = vadd.f32 %v107, %v558
  %v560 = vpop.f32.mrb[0].mxu0
  %561 = vmatprep.mubr.bf16.mxu0 0
  %562 = vmatmul.mubr.bf16.gmra.mrb[0].mxu0 %v365
  %v563 = vpop.f32.mrb[0].mxu0
  %v564 = vadd.f32 %v107, %v563
  %v565 = vpop.f32.mrb[0].mxu0
  %v566 = vpop.f32.mrb[0].mxu0
  %v567 = vadd.f32 %v107, %v566
  %v568 = vpop.f32.mrb[0].mxu0
  %569 = vmatprep.mubr.bf16.mxu0 0
  %570 = vmatmul.mubr.bf16.gmra.mrb[0].mxu0 %v368
  %v571 = vpop.f32.mrb[0].mxu0
  %v572 = vadd.f32 %v107, %v571
  %v573 = vpop.f32.mrb[0].mxu0
  %v574 = vpop.f32.mrb[0].mxu0
  %v575 = vadd.f32 %v107, %v574
  %v576 = vpop.f32.mrb[0].mxu0
  %577 = vmatprep.mubr.bf16.mxu0 0
  %578 = vmatmul.mubr.bf16.gmra.mrb[0].mxu0 %v371
  %v579 = vpop.f32.mrb[0].mxu0
  %v580 = vadd.f32 %v107, %v579
  %v581 = vpop.f32.mrb[0].mxu0
  %v582 = vpop.f32.mrb[0].mxu0
  %v583 = vadd.f32 %v107, %v582
  %v584 = vpop.f32.mrb[0].mxu0
  %585 = vmatprep.mubr.bf16.mxu0 0
  %586 = vmatmul.mubr.bf16.gmra.mrb[0].mxu0 %v374
  %v587 = vpop.f32.mrb[0].mxu0
  %v588 = vadd.f32 %v107, %v587
  %v589 = vpop.f32.mrb[0].mxu0
  %v590 = vpop.f32.mrb[0].mxu0
  %v591 = vadd.f32 %v107, %v590
  %v592 = vpop.f32.mrb[0].mxu0
  %593 = vmatprep.mubr.bf16.mxu0 0
  %594 = vmatmul.mubr.bf16.gmra.mrb[0].mxu0 %v377
  %v595 = vpop.f32.mrb[0].mxu0
  %v596 = vadd.f32 %v107, %v595
  %v597 = vpop.f32.mrb[0].mxu0
  %v598 = vpop.f32.mrb[0].mxu0
  %v599 = vadd.f32 %v107, %v598
  %v600 = vpop.f32.mrb[0].mxu0
  %601 = vmatprep.mubr.bf16.mxu0 0
  %602 = vmatmul.mubr.bf16.gmra.mrb[0].mxu0 %v380
  %v603 = vpop.f32.mrb[0].mxu0
  %v604 = vadd.f32 %v107, %v603
  %v605 = vpop.f32.mrb[0].mxu0
  %v606 = vpop.f32.mrb[0].mxu0
  %v607 = vadd.f32 %v107, %v606
  %v608 = vpop.f32.mrb[0].mxu0
  %609 = vmatprep.mubr.bf16.mxu0 0
  %610 = vmatmul.mubr.bf16.gmra.mrb[0].mxu0 %v383
  %v611 = vpop.f32.mrb[0].mxu0
  %v612 = vadd.f32 %v107, %v611
  %v613 = vpop.f32.mrb[0].mxu0
  %v614 = vpop.f32.mrb[0].mxu0
  %v615 = vadd.f32 %v107, %v614
  %v616 = vpop.f32.mrb[0].mxu0
  %617 = vmatprep.mubr.bf16.mxu0 0
  %618 = vmatmul.mubr.bf16.gmra.mrb[0].mxu0 %v386
  %v619 = vpop.f32.mrb[0].mxu0
  %v620 = vadd.f32 %v107, %v619
  %v621 = vpop.f32.mrb[0].mxu0
  %v622 = vpop.f32.mrb[0].mxu0
  %v623 = vadd.f32 %v107, %v622
  %v624 = vpop.f32.mrb[0].mxu0
  %625 = vmatprep.mubr.bf16.mxu0 0
  %626 = vmatmul.mubr.bf16.gmra.mrb[0].mxu0 %v389
  %v627 = vpop.f32.mrb[0].mxu0
  %v628 = vadd.f32 %v107, %v627
  %v629 = vpop.f32.mrb[0].mxu0
  %v630 = vpop.f32.mrb[0].mxu0
  %v631 = vadd.f32 %v107, %v630
  %v632 = vpop.f32.mrb[0].mxu0
  %633 = vmatprep.mubr.bf16.mxu0 0
  %634 = vmatmul.mubr.bf16.gmra.mrb[0].mxu0 %v392
  %v635 = vpop.f32.mrb[0].mxu0
  %v636 = vadd.f32 %v107, %v635
  %v637 = vpop.f32.mrb[0].mxu0
  %v638 = vpop.f32.mrb[0].mxu0
  %v639 = vadd.f32 %v107, %v638
  %v640 = vpop.f32.mrb[0].mxu0
  %641 = vmatprep.mubr.bf16.mxu0 0
  %642 = vmatmul.mubr.bf16.gmra.mrb[0].mxu0 %v395
  %v643 = vpop.f32.mrb[0].mxu0
  %v644 = vadd.f32 %v107, %v643
  %v645 = vpop.f32.mrb[0].mxu0
  %v646 = vpop.f32.mrb[0].mxu0
  %v647 = vadd.f32 %v107, %v646
  %v648 = vpop.f32.mrb[0].mxu0
  %649 = vmatprep.mubr.bf16.mxu0 0
  %650 = vmatmul.mubr.bf16.gmra.mrb[0].mxu0 %v398
  %v651 = vpop.f32.mrb[0].mxu0
  %v652 = vadd.f32 %v107, %v651
  %v653 = vpop.f32.mrb[0].mxu0
  %v654 = vpop.f32.mrb[0].mxu0
  %v655 = vadd.f32 %v107, %v654
  %v656 = vpop.f32.mrb[0].mxu0
  %657 = vmatprep.mubr.bf16.mxu0 0
  %658 = vmatmul.mubr.bf16.gmra.mrb[0].mxu0 %v401
  %v659 = vpop.f32.mrb[0].mxu0
  %v660 = vadd.f32 %v107, %v659
  %v661 = vpop.f32.mrb[0].mxu0
  %v662 = vpop.f32.mrb[0].mxu0
  %v663 = vadd.f32 %v107, %v662
  %v664 = vpop.f32.mrb[0].mxu0
  %665 = vmatprep.mubr.bf16.mxu0 0
  %666 = vmatmul.mubr.bf16.gmra.mrb[0].mxu0 %v404
  %v667 = vpop.f32.mrb[0].mxu0
  %v668 = vadd.f32 %v107, %v667
  %v669 = vpop.f32.mrb[0].mxu0
  %v670 = vpop.f32.mrb[0].mxu0
  %v671 = vadd.f32 %v107, %v670
  %v672 = vpop.f32.mrb[0].mxu0
  %673 = vmatprep.mubr.bf16.mxu0 0
  %674 = vmatmul.mubr.bf16.gmra.mrb[0].mxu0 %v407
  %v675 = vpop.f32.mrb[0].mxu0
  %v676 = vadd.f32 %v107, %v675
  %v677 = vpop.f32.mrb[0].mxu0
  %v678 = vpop.f32.mrb[0].mxu0
  %v679 = vadd.f32 %v107, %v678
  %v680 = vpop.f32.mrb[0].mxu0
  %681 = vmatprep.mubr.bf16.mxu0 0
  %682 = vmatmul.mubr.bf16.gmra.mrb[0].mxu0 %v410
  %v683 = vpop.f32.mrb[0].mxu0
  %v684 = vadd.f32 %v107, %v683
  %v685 = vpop.f32.mrb[0].mxu0
  %v686 = vpop.f32.mrb[0].mxu0
  %v687 = vadd.f32 %v107, %v686
  %v688 = vpop.f32.mrb[0].mxu0
  %689 = vmatprep.mubr.bf16.mxu0 0
  %690 = vmatmul.mubr.bf16.gmra.mrb[0].mxu0 %v413
  %v691 = vpop.f32.mrb[0].mxu0
  %v692 = vadd.f32 %v107, %v691
  %v693 = vpop.f32.mrb[0].mxu0
  %v694 = vpop.f32.mrb[0].mxu0
  %v695 = vadd.f32 %v107, %v694
  %v696 = vpop.f32.mrb[0].mxu0
  %697 = vmatprep.mubr.bf16.mxu0 0
  %698 = vmatmul.mubr.bf16.gmra.mrb[0].mxu0 %v416
  %v699 = vpop.f32.mrb[0].mxu0
  %v700 = vadd.f32 %v107, %v699
  %v701 = vpop.f32.mrb[0].mxu0
  %v702 = vpop.f32.mrb[0].mxu0
  %v703 = vadd.f32 %v107, %v702
  %v704 = vpop.f32.mrb[0].mxu0
  %705 = vmatprep.mubr.bf16.mxu0 0
  %706 = vmatmul.mubr.bf16.gmra.mrb[0].mxu0 %v419
  %v707 = vpop.f32.mrb[0].mxu0
  %v708 = vadd.f32 %v107, %v707
  %v709 = vpop.f32.mrb[0].mxu0
  %v710 = vpop.f32.mrb[0].mxu0
  %v711 = vadd.f32 %v107, %v710
  %v712 = vpop.f32.mrb[0].mxu0
  %713 = vmatprep.mubr.bf16.mxu0 0
  %714 = vmatmul.mubr.bf16.gmra.mrb[0].mxu0 %v422
  %v715 = vpop.f32.mrb[0].mxu0
  %v716 = vadd.f32 %v107, %v715
  %v717 = vpop.f32.mrb[0].mxu0
  %v718 = vpop.f32.mrb[0].mxu0
  %v719 = vadd.f32 %v107, %v718
  %v720 = vpop.f32.mrb[0].mxu0
  %721 = vmatprep.mubr.bf16.mxu0 0
  %722 = vmatmul.mubr.bf16.gmra.mrb[0].mxu0 %v425
  %v723 = vpop.f32.mrb[0].mxu0
  %v724 = vadd.f32 %v107, %v723
  %v725 = vpop.f32.mrb[0].mxu0
  %v726 = vpop.f32.mrb[0].mxu0
  %v727 = vadd.f32 %v107, %v726
  %v728 = vpop.f32.mrb[0].mxu0
  %729 = vmatprep.mubr.bf16.mxu0 0
  %730 = vmatmul.mubr.bf16.gmra.mrb[0].mxu0 %v428
  %v731 = vpop.f32.mrb[0].mxu0
  %v732 = vadd.f32 %v107, %v731
  %v733 = vpop.f32.mrb[0].mxu0
  %v734 = vpop.f32.mrb[0].mxu0
  %v735 = vadd.f32 %v107, %v734
  %v736 = vpop.f32.mrb[0].mxu0
  %737 = vmatprep.mubr.bf16.mxu0 0
  %738 = vmatmul.mubr.bf16.gmra.mrb[0].mxu0 %v431
  %v739 = vpop.f32.mrb[0].mxu0
  %v740 = vadd.f32 %v107, %v739
  %v741 = vpop.f32.mrb[0].mxu0
  %v742 = vpop.f32.mrb[0].mxu0
  %v743 = vadd.f32 %v107, %v742
  %v744 = vpop.f32.mrb[0].mxu0
  %745 = vmatprep.mubr.bf16.mxu0 0
  %746 = vmatmul.mubr.bf16.gmra.mrb[0].mxu0 %v434
  %v747 = vpop.f32.mrb[0].mxu0
  %v748 = vadd.f32 %v107, %v747
  %v749 = vpop.f32.mrb[0].mxu0
  %v750 = vpop.f32.mrb[0].mxu0
  %v751 = vadd.f32 %v107, %v750
  %v752 = vpop.f32.mrb[0].mxu0
  %753 = vmatprep.mubr.bf16.mxu0 0
  %754 = vmatmul.mubr.bf16.gmra.mrb[0].mxu0 %v437
  %v755 = vpop.f32.mrb[0].mxu0
  %v756 = vadd.f32 %v107, %v755
  %v757 = vpop.f32.mrb[0].mxu0
  %v758 = vpop.f32.mrb[0].mxu0
  %v759 = vadd.f32 %v107, %v758
  %v760 = vpop.f32.mrb[0].mxu0
  %761 = vmatprep.mubr.bf16.mxu0 0
  %762 = vmatmul.mubr.bf16.gmra.mrb[0].mxu0 %v440
  %v763 = vpop.f32.mrb[0].mxu0
  %v764 = vadd.f32 %v107, %v763
  %v765 = vpop.f32.mrb[0].mxu0
  %v766 = vpop.f32.mrb[0].mxu0
  %v767 = vadd.f32 %v107, %v766
  %v768 = vpop.f32.mrb[0].mxu0
  %769 = vmatprep.mubr.bf16.mxu0 0
  %770 = vmatmul.mubr.bf16.gmra.mrb[0].mxu0 %v443
  %v771 = vpop.f32.mrb[0].mxu0
  %v772 = vadd.f32 %v107, %v771
  %v773 = vpop.f32.mrb[0].mxu0
  %v774 = vpop.f32.mrb[0].mxu0
  %v775 = vpop.f32.mrb[0].mxu0
  %776 = vdwg.mxu0
  %v777 = vsub.f32 0.0, %v484
  %v778 = vsub.f32 0.0, %v487
  %v779 = vsub.f32 0.0, %v492
  %v780 = vsub.f32 0.0, %v495
  %v781 = vsub.f32 0.0, %v500
  %v782 = vsub.f32 0.0, %v503
  %v783 = vsub.f32 0.0, %v508
  %v784 = vsub.f32 0.0, %v511
  %v785 = vsub.f32 0.0, %v516
  %v786 = vsub.f32 0.0, %v519
  %v787 = vsub.f32 0.0, %v524
  %v788 = vsub.f32 0.0, %v527
  %v789 = vsub.f32 0.0, %v532
  %v790 = vsub.f32 0.0, %v535
  %v791 = vsub.f32 0.0, %v540
  %v792 = vsub.f32 0.0, %v543
  %v793 = vsub.f32 0.0, %v548
  %v794 = vsub.f32 0.0, %v551
  %v795 = vsub.f32 0.0, %v556
  %v796 = vsub.f32 0.0, %v559
  %v797 = vsub.f32 0.0, %v564
  %v798 = vsub.f32 0.0, %v567
  %v799 = vsub.f32 0.0, %v572
  %v800 = vsub.f32 0.0, %v575
  %v801 = vsub.f32 0.0, %v580
  %v802 = vsub.f32 0.0, %v583
  %v803 = vsub.f32 0.0, %v588
  %v804 = vsub.f32 0.0, %v591
  %v805 = vsub.f32 0.0, %v596
  %v806 = vsub.f32 0.0, %v599
  %v807 = vsub.f32 0.0, %v604
  %v808 = vsub.f32 0.0, %v607
  %v809 = vsub.f32 0.0, %v612
  %v810 = vsub.f32 0.0, %v615
  %v811 = vsub.f32 0.0, %v620
  %v812 = vsub.f32 0.0, %v623
  %v813 = vsub.f32 0.0, %v628
  %v814 = vsub.f32 0.0, %v631
  %v815 = vsub.f32 0.0, %v636
  %v816 = vsub.f32 0.0, %v639
  %v817 = vsub.f32 0.0, %v644
  %v818 = vsub.f32 0.0, %v647
  %v819 = vsub.f32 0.0, %v652
  %v820 = vsub.f32 0.0, %v655
  %v821 = vsub.f32 0.0, %v660
  %v822 = vsub.f32 0.0, %v663
  %v823 = vsub.f32 0.0, %v668
  %v824 = vsub.f32 0.0, %v671
  %v825 = vsub.f32 0.0, %v676
  %v826 = vsub.f32 0.0, %v679
  %v827 = vsub.f32 0.0, %v684
  %v828 = vsub.f32 0.0, %v687
  %v829 = vsub.f32 0.0, %v692
  %v830 = vsub.f32 0.0, %v695
  %v831 = vsub.f32 0.0, %v700
  %v832 = vsub.f32 0.0, %v703
  %v833 = vsub.f32 0.0, %v708
  %v834 = vsub.f32 0.0, %v711
  %v835 = vsub.f32 0.0, %v716
  %v836 = vsub.f32 0.0, %v719
  %v837 = vsub.f32 0.0, %v724
  %v838 = vsub.f32 0.0, %v727
  %v839 = vsub.f32 0.0, %v732
  %v840 = vsub.f32 0.0, %v735
  %v841 = vsub.f32 0.0, %v740
  %v842 = vsub.f32 0.0, %v743
  %v843 = vsub.f32 0.0, %v748
  %v844 = vsub.f32 0.0, %v751
  %v845 = vsub.f32 0.0, %v756
  %v846 = vsub.f32 0.0, %v759
  %v847 = vsub.f32 0.0, %v764
  %v848 = vsub.f32 0.0, %v767
  %v849 = vsub.f32 0.0, %v772
  %v850 = vmul.f32 %v777, 1.442695
  %v851 = vpow.pop %v850
  %v852 = vmul.f32 %v778, 1.442695
  %v853 = vpow.pop %v852
  %v854 = vmul.f32 %v779, 1.442695
  %v855 = vpow.pop %v854
  %v856 = vmul.f32 %v780, 1.442695
  %v857 = vpow.pop %v856
  %v858 = vmul.f32 %v781, 1.442695
  %v859 = vpow.pop %v858
  %v860 = vmul.f32 %v782, 1.442695
  %v861 = vpow.pop %v860
  %v862 = vmul.f32 %v783, 1.442695
  %v863 = vpow.pop %v862
  %v864 = vmul.f32 %v784, 1.442695
  %v865 = vpow.pop %v864
  %v866 = vmul.f32 %v785, 1.442695
  %v867 = vpow.pop %v866
  %v868 = vmul.f32 %v786, 1.442695
  %v869 = vpow.pop %v868
  %v870 = vmul.f32 %v787, 1.442695
  %v871 = vpow.pop %v870
  %v872 = vmul.f32 %v788, 1.442695
  %v873 = vpow.pop %v872
  %v874 = vmul.f32 %v789, 1.442695
  %v875 = vpow.pop %v874
  %v876 = vmul.f32 %v790, 1.442695
  %v877 = vpow.pop %v876
  %v878 = vmul.f32 %v791, 1.442695
  %v879 = vpow.pop %v878
  %v880 = vmul.f32 %v792, 1.442695
  %v881 = vpow.pop %v880
  %v882 = vmul.f32 %v793, 1.442695
  %v883 = vpow.pop %v882
  %v884 = vmul.f32 %v794, 1.442695
  %v885 = vpow.pop %v884
  %v886 = vmul.f32 %v795, 1.442695
  %v887 = vpow.pop %v886
  %v888 = vmul.f32 %v796, 1.442695
  %v889 = vpow.pop %v888
  %v890 = vmul.f32 %v797, 1.442695
  %v891 = vpow.pop %v890
  %v892 = vmul.f32 %v798, 1.442695
  %v893 = vpow.pop %v892
  %v894 = vmul.f32 %v799, 1.442695
  %v895 = vpow.pop %v894
  %v896 = vmul.f32 %v800, 1.442695
  %v897 = vpow.pop %v896
  %v898 = vmul.f32 %v801, 1.442695
  %v899 = vpow.pop %v898
  %v900 = vmul.f32 %v802, 1.442695
  %v901 = vpow.pop %v900
  %v902 = vmul.f32 %v803, 1.442695
  %v903 = vpow.pop %v902
  %v904 = vmul.f32 %v804, 1.442695
  %v905 = vpow.pop %v904
  %v906 = vmul.f32 %v805, 1.442695
  %v907 = vpow.pop %v906
  %v908 = vmul.f32 %v806, 1.442695
  %v909 = vpow.pop %v908
  %v910 = vmul.f32 %v807, 1.442695
  %v911 = vpow.pop %v910
  %v912 = vmul.f32 %v808, 1.442695
  %v913 = vpow.pop %v912
  %v914 = vmul.f32 %v809, 1.442695
  %v915 = vpow.pop %v914
  %v916 = vmul.f32 %v810, 1.442695
  %v917 = vpow.pop %v916
  %v918 = vmul.f32 %v811, 1.442695
  %v919 = vpow.pop %v918
  %v920 = vmul.f32 %v812, 1.442695
  %v921 = vpow.pop %v920
  %v922 = vmul.f32 %v813, 1.442695
  %v923 = vpow.pop %v922
  %v924 = vmul.f32 %v814, 1.442695
  %v925 = vpow.pop %v924
  %v926 = vmul.f32 %v815, 1.442695
  %v927 = vpow.pop %v926
  %v928 = vmul.f32 %v816, 1.442695
  %v929 = vpow.pop %v928
  %v930 = vmul.f32 %v817, 1.442695
  %v931 = vpow.pop %v930
  %v932 = vmul.f32 %v818, 1.442695
  %v933 = vpow.pop %v932
  %v934 = vmul.f32 %v819, 1.442695
  %v935 = vpow.pop %v934
  %v936 = vmul.f32 %v820, 1.442695
  %v937 = vpow.pop %v936
  %v938 = vmul.f32 %v821, 1.442695
  %v939 = vpow.pop %v938
  %v940 = vmul.f32 %v822, 1.442695
  %v941 = vpow.pop %v940
  %v942 = vmul.f32 %v823, 1.442695
  %v943 = vpow.pop %v942
  %v944 = vmul.f32 %v824, 1.442695
  %v945 = vpow.pop %v944
  %v946 = vmul.f32 %v825, 1.442695
  %v947 = vpow.pop %v946
  %v948 = vmul.f32 %v826, 1.442695
  %v949 = vpow.pop %v948
  %v950 = vmul.f32 %v827, 1.442695
  %v951 = vpow.pop %v950
  %v952 = vmul.f32 %v828, 1.442695
  %v953 = vpow.pop %v952
  %v954 = vmul.f32 %v829, 1.442695
  %v955 = vpow.pop %v954
  %v956 = vmul.f32 %v830, 1.442695
  %v957 = vpow.pop %v956
  %v958 = vmul.f32 %v831, 1.442695
  %v959 = vpow.pop %v958
  %v960 = vmul.f32 %v832, 1.442695
  %v961 = vpow.pop %v960
  %v962 = vmul.f32 %v833, 1.442695
  %v963 = vpow.pop %v962
  %v964 = vmul.f32 %v834, 1.442695
  %v965 = vpow.pop %v964
  %v966 = vmul.f32 %v835, 1.442695
  %v967 = vpow.pop %v966
  %v968 = vmul.f32 %v836, 1.442695
  %v969 = vpow.pop %v968
  %v970 = vmul.f32 %v837, 1.442695
  %v971 = vpow.pop %v970
  %v972 = vmul.f32 %v838, 1.442695
  %v973 = vpow.pop %v972
  %v974 = vmul.f32 %v839, 1.442695
  %v975 = vpow.pop %v974
  %v976 = vmul.f32 %v840, 1.442695
  %v977 = vpow.pop %v976
  %v978 = vmul.f32 %v841, 1.442695
  %v979 = vpow.pop %v978
  %v980 = vmul.f32 %v842, 1.442695
  %v981 = vpow.pop %v980
  %v982 = vmul.f32 %v843, 1.442695
  %v983 = vpow.pop %v982
  %v984 = vmul.f32 %v844, 1.442695
  %v985 = vpow.pop %v984
  %v986 = vmul.f32 %v845, 1.442695
  %v987 = vpow.pop %v986
  %v988 = vmul.f32 %v846, 1.442695
  %v989 = vpow.pop %v988
  %v990 = vmul.f32 %v847, 1.442695
  %v991 = vpow.pop %v990
  %v992 = vmul.f32 %v848, 1.442695
  %v993 = vpow.pop %v992
  %v994 = vmul.f32 %v849, 1.442695
  %v995 = vpow.pop %v994
  %v996 = vadd.f32 %v851, 1.0
  %v997 = vadd.f32 %v853, 1.0
  %v998 = vadd.f32 %v855, 1.0
  %v999 = vadd.f32 %v857, 1.0
  %v1000 = vadd.f32 %v859, 1.0
  %v1001 = vadd.f32 %v861, 1.0
  %v1002 = vadd.f32 %v863, 1.0
  %v1003 = vadd.f32 %v865, 1.0
  %v1004 = vadd.f32 %v867, 1.0
  %v1005 = vadd.f32 %v869, 1.0
  %v1006 = vadd.f32 %v871, 1.0
  %v1007 = vadd.f32 %v873, 1.0
  %v1008 = vadd.f32 %v875, 1.0
  %v1009 = vadd.f32 %v877, 1.0
  %v1010 = vadd.f32 %v879, 1.0
  %v1011 = vadd.f32 %v881, 1.0
  %v1012 = vadd.f32 %v883, 1.0
  %v1013 = vadd.f32 %v885, 1.0
  %v1014 = vadd.f32 %v887, 1.0
  %v1015 = vadd.f32 %v889, 1.0
  %v1016 = vadd.f32 %v891, 1.0
  %v1017 = vadd.f32 %v893, 1.0
  %v1018 = vadd.f32 %v895, 1.0
  %v1019 = vadd.f32 %v897, 1.0
  %v1020 = vadd.f32 %v899, 1.0
  %v1021 = vadd.f32 %v901, 1.0
  %v1022 = vadd.f32 %v903, 1.0
  %v1023 = vadd.f32 %v905, 1.0
  %v1024 = vadd.f32 %v907, 1.0
  %v1025 = vadd.f32 %v909, 1.0
  %v1026 = vadd.f32 %v911, 1.0
  %v1027 = vadd.f32 %v913, 1.0
  %v1028 = vadd.f32 %v915, 1.0
  %v1029 = vadd.f32 %v917, 1.0
  %v1030 = vadd.f32 %v919, 1.0
  %v1031 = vadd.f32 %v921, 1.0
  %v1032 = vadd.f32 %v923, 1.0
  %v1033 = vadd.f32 %v925, 1.0
  %v1034 = vadd.f32 %v927, 1.0
  %v1035 = vadd.f32 %v929, 1.0
  %v1036 = vadd.f32 %v931, 1.0
  %v1037 = vadd.f32 %v933, 1.0
  %v1038 = vadd.f32 %v935, 1.0
  %v1039 = vadd.f32 %v937, 1.0
  %v1040 = vadd.f32 %v939, 1.0
  %v1041 = vadd.f32 %v941, 1.0
  %v1042 = vadd.f32 %v943, 1.0
  %v1043 = vadd.f32 %v945, 1.0
  %v1044 = vadd.f32 %v947, 1.0
  %v1045 = vadd.f32 %v949, 1.0
  %v1046 = vadd.f32 %v951, 1.0
  %v1047 = vadd.f32 %v953, 1.0
  %v1048 = vadd.f32 %v955, 1.0
  %v1049 = vadd.f32 %v957, 1.0
  %v1050 = vadd.f32 %v959, 1.0
  %v1051 = vadd.f32 %v961, 1.0
  %v1052 = vadd.f32 %v963, 1.0
  %v1053 = vadd.f32 %v965, 1.0
  %v1054 = vadd.f32 %v967, 1.0
  %v1055 = vadd.f32 %v969, 1.0
  %v1056 = vadd.f32 %v971, 1.0
  %v1057 = vadd.f32 %v973, 1.0
  %v1058 = vadd.f32 %v975, 1.0
  %v1059 = vadd.f32 %v977, 1.0
  %v1060 = vadd.f32 %v979, 1.0
  %v1061 = vadd.f32 %v981, 1.0
  %v1062 = vadd.f32 %v983, 1.0
  %v1063 = vadd.f32 %v985, 1.0
  %v1064 = vadd.f32 %v987, 1.0
  %v1065 = vadd.f32 %v989, 1.0
  %v1066 = vadd.f32 %v991, 1.0
  %v1067 = vadd.f32 %v993, 1.0
  %v1068 = vadd.f32 %v995, 1.0
  %v1069 = vrcp.pop %v996
  %v1070 = vrcp.pop %v997
  %v1071 = vrcp.pop %v998
  %v1072 = vrcp.pop %v999
  %v1073 = vrcp.pop %v1000
  %v1074 = vrcp.pop %v1001
  %v1075 = vrcp.pop %v1002
  %v1076 = vrcp.pop %v1003
  %v1077 = vrcp.pop %v1004
  %v1078 = vrcp.pop %v1005
  %v1079 = vrcp.pop %v1006
  %v1080 = vrcp.pop %v1007
  %v1081 = vrcp.pop %v1008
  %v1082 = vrcp.pop %v1009
  %v1083 = vrcp.pop %v1010
  %v1084 = vrcp.pop %v1011
  %v1085 = vrcp.pop %v1012
  %v1086 = vrcp.pop %v1013
  %v1087 = vrcp.pop %v1014
  %v1088 = vrcp.pop %v1015
  %v1089 = vrcp.pop %v1016
  %v1090 = vrcp.pop %v1017
  %v1091 = vrcp.pop %v1018
  %v1092 = vrcp.pop %v1019
  %v1093 = vrcp.pop %v1020
  %v1094 = vrcp.pop %v1021
  %v1095 = vrcp.pop %v1022
  %v1096 = vrcp.pop %v1023
  %v1097 = vrcp.pop %v1024
  %v1098 = vrcp.pop %v1025
  %v1099 = vrcp.pop %v1026
  %v1100 = vrcp.pop %v1027
  %v1101 = vrcp.pop %v1028
  %v1102 = vrcp.pop %v1029
  %v1103 = vrcp.pop %v1030
  %v1104 = vrcp.pop %v1031
  %v1105 = vrcp.pop %v1032
  %v1106 = vrcp.pop %v1033
  %v1107 = vrcp.pop %v1034
  %v1108 = vrcp.pop %v1035
  %v1109 = vrcp.pop %v1036
  %v1110 = vrcp.pop %v1037
  %v1111 = vrcp.pop %v1038
  %v1112 = vrcp.pop %v1039
  %v1113 = vrcp.pop %v1040
  %v1114 = vrcp.pop %v1041
  %v1115 = vrcp.pop %v1042
  %v1116 = vrcp.pop %v1043
  %v1117 = vrcp.pop %v1044
  %v1118 = vrcp.pop %v1045
  %v1119 = vrcp.pop %v1046
  %v1120 = vrcp.pop %v1047
  %v1121 = vrcp.pop %v1048
  %v1122 = vrcp.pop %v1049
  %v1123 = vrcp.pop %v1050
  %v1124 = vrcp.pop %v1051
  %v1125 = vrcp.pop %v1052
  %v1126 = vrcp.pop %v1053
  %v1127 = vrcp.pop %v1054
  %v1128 = vrcp.pop %v1055
  %v1129 = vrcp.pop %v1056
  %v1130 = vrcp.pop %v1057
  %v1131 = vrcp.pop %v1058
  %v1132 = vrcp.pop %v1059
  %v1133 = vrcp.pop %v1060
  %v1134 = vrcp.pop %v1061
  %v1135 = vrcp.pop %v1062
  %v1136 = vrcp.pop %v1063
  %v1137 = vrcp.pop %v1064
  %v1138 = vrcp.pop %v1065
  %v1139 = vrcp.pop %v1066
  %v1140 = vrcp.pop %v1067
  %v1141 = vrcp.pop %v1068
  %v1142 = vmul.f32 %v484, %v1069
  %v1143 = vmul.f32 %v487, %v1070
  %v1144 = vmul.f32 %v492, %v1071
  %v1145 = vmul.f32 %v495, %v1072
  %v1146 = vmul.f32 %v500, %v1073
  %v1147 = vmul.f32 %v503, %v1074
  %v1148 = vmul.f32 %v508, %v1075
  %v1149 = vmul.f32 %v511, %v1076
  %v1150 = vmul.f32 %v516, %v1077
  %v1151 = vmul.f32 %v519, %v1078
  %v1152 = vmul.f32 %v524, %v1079
  %v1153 = vmul.f32 %v527, %v1080
  %v1154 = vmul.f32 %v532, %v1081
  %v1155 = vmul.f32 %v535, %v1082
  %v1156 = vmul.f32 %v540, %v1083
  %v1157 = vmul.f32 %v543, %v1084
  %v1158 = vmul.f32 %v548, %v1085
  %v1159 = vmul.f32 %v551, %v1086
  %v1160 = vmul.f32 %v556, %v1087
  %v1161 = vmul.f32 %v559, %v1088
  %v1162 = vmul.f32 %v564, %v1089
  %v1163 = vmul.f32 %v567, %v1090
  %v1164 = vmul.f32 %v572, %v1091
  %v1165 = vmul.f32 %v575, %v1092
  %v1166 = vmul.f32 %v580, %v1093
  %v1167 = vmul.f32 %v583, %v1094
  %v1168 = vmul.f32 %v588, %v1095
  %v1169 = vmul.f32 %v591, %v1096
  %v1170 = vmul.f32 %v596, %v1097
  %v1171 = vmul.f32 %v599, %v1098
  %v1172 = vmul.f32 %v604, %v1099
  %v1173 = vmul.f32 %v607, %v1100
  %v1174 = vmul.f32 %v612, %v1101
  %v1175 = vmul.f32 %v615, %v1102
  %v1176 = vmul.f32 %v620, %v1103
  %v1177 = vmul.f32 %v623, %v1104
  %v1178 = vmul.f32 %v628, %v1105
  %v1179 = vmul.f32 %v631, %v1106
  %v1180 = vmul.f32 %v636, %v1107
  %v1181 = vmul.f32 %v639, %v1108
  %v1182 = vmul.f32 %v644, %v1109
  %v1183 = vmul.f32 %v647, %v1110
  %v1184 = vmul.f32 %v652, %v1111
  %v1185 = vmul.f32 %v655, %v1112
  %v1186 = vmul.f32 %v660, %v1113
  %v1187 = vmul.f32 %v663, %v1114
  %v1188 = vmul.f32 %v668, %v1115
  %v1189 = vmul.f32 %v671, %v1116
  %v1190 = vmul.f32 %v676, %v1117
  %v1191 = vmul.f32 %v679, %v1118
  %v1192 = vmul.f32 %v684, %v1119
  %v1193 = vmul.f32 %v687, %v1120
  %v1194 = vmul.f32 %v692, %v1121
  %v1195 = vmul.f32 %v695, %v1122
  %v1196 = vmul.f32 %v700, %v1123
  %v1197 = vmul.f32 %v703, %v1124
  %v1198 = vmul.f32 %v708, %v1125
  %v1199 = vmul.f32 %v711, %v1126
  %v1200 = vmul.f32 %v716, %v1127
  %v1201 = vmul.f32 %v719, %v1128
  %v1202 = vmul.f32 %v724, %v1129
  %v1203 = vmul.f32 %v727, %v1130
  %v1204 = vmul.f32 %v732, %v1131
  %v1205 = vmul.f32 %v735, %v1132
  %v1206 = vmul.f32 %v740, %v1133
  %v1207 = vmul.f32 %v743, %v1134
  %v1208 = vmul.f32 %v748, %v1135
  %v1209 = vmul.f32 %v751, %v1136
  %v1210 = vmul.f32 %v756, %v1137
  %v1211 = vmul.f32 %v759, %v1138
  %v1212 = vmul.f32 %v764, %v1139
  %v1213 = vmul.f32 %v767, %v1140
  %v1214 = vmul.f32 %v772, %v1141
  %v1215 = vpack.c.bf16 %v1143, %v1142
  %v1216 = vpack.c.bf16 %v1145, %v1144
  %v1217 = vpack.c.bf16 %v1147, %v1146
  %v1218 = vpack.c.bf16 %v1149, %v1148
  %v1219 = vpack.c.bf16 %v1151, %v1150
  %v1220 = vpack.c.bf16 %v1153, %v1152
  %v1221 = vpack.c.bf16 %v1155, %v1154
  %v1222 = vpack.c.bf16 %v1157, %v1156
  %v1223 = vpack.c.bf16 %v1159, %v1158
  %v1224 = vpack.c.bf16 %v1161, %v1160
  %v1225 = vpack.c.bf16 %v1163, %v1162
  %v1226 = vpack.c.bf16 %v1165, %v1164
  %v1227 = vpack.c.bf16 %v1167, %v1166
  %v1228 = vpack.c.bf16 %v1169, %v1168
  %v1229 = vpack.c.bf16 %v1171, %v1170
  %v1230 = vpack.c.bf16 %v1173, %v1172
  %v1231 = vpack.c.bf16 %v1175, %v1174
  %v1232 = vpack.c.bf16 %v1177, %v1176
  %v1233 = vpack.c.bf16 %v1179, %v1178
  %v1234 = vpack.c.bf16 %v1181, %v1180
  %v1235 = vpack.c.bf16 %v1183, %v1182
  %v1236 = vpack.c.bf16 %v1185, %v1184
  %v1237 = vpack.c.bf16 %v1187, %v1186
  %v1238 = vpack.c.bf16 %v1189, %v1188
  %v1239 = vpack.c.bf16 %v1191, %v1190
  %v1240 = vpack.c.bf16 %v1193, %v1192
  %v1241 = vpack.c.bf16 %v1195, %v1194
  %v1242 = vpack.c.bf16 %v1197, %v1196
  %v1243 = vpack.c.bf16 %v1199, %v1198
  %v1244 = vpack.c.bf16 %v1201, %v1200
  %v1245 = vpack.c.bf16 %v1203, %v1202
  %v1246 = vpack.c.bf16 %v1205, %v1204
  %v1247 = vpack.c.bf16 %v1207, %v1206
  %v1248 = vpack.c.bf16 %v1209, %v1208
  %v1249 = vpack.c.bf16 %v1211, %v1210
  %v1250 = vpack.c.bf16 %v1213, %v1212
  %v1251 = vpack.c.bf16 %v1214, %v1214
  %v1289 = vunpack.c.l.b16 %v1215
  %v1290 = vunpack.c.h.b16 %v1215
  %v1291 = vunpack.c.l.b16 %v1216
  %v1292 = vunpack.c.h.b16 %v1216
  %v1293 = vunpack.c.l.b16 %v1217
  %v1294 = vunpack.c.h.b16 %v1217
  %v1295 = vunpack.c.l.b16 %v1218
  %v1296 = vunpack.c.h.b16 %v1218
  %v1297 = vunpack.c.l.b16 %v1219
  %v1298 = vunpack.c.h.b16 %v1219
  %v1299 = vunpack.c.l.b16 %v1220
  %v1300 = vunpack.c.h.b16 %v1220
  %v1301 = vunpack.c.l.b16 %v1221
  %v1302 = vunpack.c.h.b16 %v1221
  %v1303 = vunpack.c.l.b16 %v1222
  %v1304 = vunpack.c.h.b16 %v1222
  %v1305 = vunpack.c.l.b16 %v1223
  %v1306 = vunpack.c.h.b16 %v1223
  %v1307 = vunpack.c.l.b16 %v1224
  %v1308 = vunpack.c.h.b16 %v1224
  %v1309 = vunpack.c.l.b16 %v1225
  %v1310 = vunpack.c.h.b16 %v1225
  %v1311 = vunpack.c.l.b16 %v1226
  %v1312 = vunpack.c.h.b16 %v1226
  %v1313 = vunpack.c.l.b16 %v1227
  %v1314 = vunpack.c.h.b16 %v1227
  %v1315 = vunpack.c.l.b16 %v1228
  %v1316 = vunpack.c.h.b16 %v1228
  %v1317 = vunpack.c.l.b16 %v1229
  %v1318 = vunpack.c.h.b16 %v1229
  %v1319 = vunpack.c.l.b16 %v1230
  %v1320 = vunpack.c.h.b16 %v1230
  %v1321 = vunpack.c.l.b16 %v1231
  %v1322 = vunpack.c.h.b16 %v1231
  %v1323 = vunpack.c.l.b16 %v1232
  %v1324 = vunpack.c.h.b16 %v1232
  %v1325 = vunpack.c.l.b16 %v1233
  %v1326 = vunpack.c.h.b16 %v1233
  %v1327 = vunpack.c.l.b16 %v1234
  %v1328 = vunpack.c.h.b16 %v1234
  %v1329 = vunpack.c.l.b16 %v1235
  %v1330 = vunpack.c.h.b16 %v1235
  %v1331 = vunpack.c.l.b16 %v1236
  %v1332 = vunpack.c.h.b16 %v1236
  %v1333 = vunpack.c.l.b16 %v1237
  %v1334 = vunpack.c.h.b16 %v1237
  %v1335 = vunpack.c.l.b16 %v1238
  %v1336 = vunpack.c.h.b16 %v1238
  %v1337 = vunpack.c.l.b16 %v1239
  %v1338 = vunpack.c.h.b16 %v1239
  %v1339 = vunpack.c.l.b16 %v1240
  %v1340 = vunpack.c.h.b16 %v1240
  %v1341 = vunpack.c.l.b16 %v1241
  %v1342 = vunpack.c.h.b16 %v1241
  %v1343 = vunpack.c.l.b16 %v1242
  %v1344 = vunpack.c.h.b16 %v1242
  %v1345 = vunpack.c.l.b16 %v1243
  %v1346 = vunpack.c.h.b16 %v1243
  %v1347 = vunpack.c.l.b16 %v1244
  %v1348 = vunpack.c.h.b16 %v1244
  %v1349 = vunpack.c.l.b16 %v1245
  %v1350 = vunpack.c.h.b16 %v1245
  %v1351 = vunpack.c.l.b16 %v1246
  %v1352 = vunpack.c.h.b16 %v1246
  %v1353 = vunpack.c.l.b16 %v1247
  %v1354 = vunpack.c.h.b16 %v1247
  %v1355 = vunpack.c.l.b16 %v1248
  %v1356 = vunpack.c.h.b16 %v1248
  %v1357 = vunpack.c.l.b16 %v1249
  %v1358 = vunpack.c.h.b16 %v1249
  %v1359 = vunpack.c.l.b16 %v1250
  %v1360 = vunpack.c.h.b16 %v1250
  %v1361 = vunpack.c.l.b16 %v1251
  %v1362 = vpack.c.b16 %v1289, %v1289
  %v1363 = vpack.c.b16 %v1290, %v1290
  %v1364 = vpack.c.b16 %v1291, %v1291
  %v1365 = vpack.c.b16 %v1292, %v1292
  %v1366 = vpack.c.b16 %v1293, %v1293
  %v1367 = vpack.c.b16 %v1294, %v1294
  %v1368 = vpack.c.b16 %v1295, %v1295
  %v1369 = vpack.c.b16 %v1296, %v1296
  %v1370 = vpack.c.b16 %v1297, %v1297
  %v1371 = vpack.c.b16 %v1298, %v1298
  %v1372 = vpack.c.b16 %v1299, %v1299
  %v1373 = vpack.c.b16 %v1300, %v1300
  %v1374 = vpack.c.b16 %v1301, %v1301
  %v1375 = vpack.c.b16 %v1302, %v1302
  %v1376 = vpack.c.b16 %v1303, %v1303
  %v1377 = vpack.c.b16 %v1304, %v1304
  %v1378 = vpack.c.b16 %v1305, %v1305
  %v1379 = vpack.c.b16 %v1306, %v1306
  %v1380 = vpack.c.b16 %v1307, %v1307
  %v1381 = vpack.c.b16 %v1308, %v1308
  %v1382 = vpack.c.b16 %v1309, %v1309
  %v1383 = vpack.c.b16 %v1310, %v1310
  %v1384 = vpack.c.b16 %v1311, %v1311
  %v1385 = vpack.c.b16 %v1312, %v1312
  %v1386 = vpack.c.b16 %v1313, %v1313
  %v1387 = vpack.c.b16 %v1314, %v1314
  %v1388 = vpack.c.b16 %v1315, %v1315
  %v1389 = vpack.c.b16 %v1316, %v1316
  %v1390 = vpack.c.b16 %v1317, %v1317
  %v1391 = vpack.c.b16 %v1318, %v1318
  %v1392 = vpack.c.b16 %v1319, %v1319
  %v1393 = vpack.c.b16 %v1320, %v1320
  %v1394 = vpack.c.b16 %v1321, %v1321
  %v1395 = vpack.c.b16 %v1322, %v1322
  %v1396 = vpack.c.b16 %v1323, %v1323
  %v1397 = vpack.c.b16 %v1324, %v1324
  %v1398 = vpack.c.b16 %v1325, %v1325
  %v1399 = vpack.c.b16 %v1326, %v1326
  %v1400 = vpack.c.b16 %v1327, %v1327
  %v1401 = vpack.c.b16 %v1328, %v1328
  %v1402 = vpack.c.b16 %v1329, %v1329
  %v1403 = vpack.c.b16 %v1330, %v1330
  %v1404 = vpack.c.b16 %v1331, %v1331
  %v1405 = vpack.c.b16 %v1332, %v1332
  %v1406 = vpack.c.b16 %v1333, %v1333
  %v1407 = vpack.c.b16 %v1334, %v1334
  %v1408 = vpack.c.b16 %v1335, %v1335
  %v1409 = vpack.c.b16 %v1336, %v1336
  %v1410 = vpack.c.b16 %v1337, %v1337
  %v1411 = vpack.c.b16 %v1338, %v1338
  %v1412 = vpack.c.b16 %v1339, %v1339
  %v1413 = vpack.c.b16 %v1340, %v1340
  %v1414 = vpack.c.b16 %v1341, %v1341
  %v1415 = vpack.c.b16 %v1342, %v1342
  %v1416 = vpack.c.b16 %v1343, %v1343
  %v1417 = vpack.c.b16 %v1344, %v1344
  %v1418 = vpack.c.b16 %v1345, %v1345
  %v1419 = vpack.c.b16 %v1346, %v1346
  %v1420 = vpack.c.b16 %v1347, %v1347
  %v1421 = vpack.c.b16 %v1348, %v1348
  %v1422 = vpack.c.b16 %v1349, %v1349
  %v1423 = vpack.c.b16 %v1350, %v1350
  %v1424 = vpack.c.b16 %v1351, %v1351
  %v1425 = vpack.c.b16 %v1352, %v1352
  %v1426 = vpack.c.b16 %v1353, %v1353
  %v1427 = vpack.c.b16 %v1354, %v1354
  %v1428 = vpack.c.b16 %v1355, %v1355
  %v1429 = vpack.c.b16 %v1356, %v1356
  %v1430 = vpack.c.b16 %v1357, %v1357
  %v1431 = vpack.c.b16 %v1358, %v1358
  %v1432 = vpack.c.b16 %v1359, %v1359
  %v1433 = vpack.c.b16 %v1360, %v1360
  %v1434 = vpack.c.b16 %v1361, %v1361
  %vm1508 = vcmask 257024
  %1509 = vst.msk [vmem:[%s3] sm:$0xf] %vm1508, %v1362
  %1510 = vst.msk [vmem:[%s3 + $0x4] sm:$0xf] %vm1508, %v1363
  %1511 = vst.msk [vmem:[%s3 + $0x8] sm:$0xf] %vm1508, %v1364
  %1512 = vst.msk [vmem:[%s3 + $0xc] sm:$0xf] %vm1508, %v1365
  %1513 = vst.msk [vmem:[%s3 + $0x10] sm:$0xf] %vm1508, %v1366
  %1514 = vst.msk [vmem:[%s3 + $0x14] sm:$0xf] %vm1508, %v1367
  %1515 = vst.msk [vmem:[%s3 + $0x18] sm:$0xf] %vm1508, %v1368
  %1516 = vst.msk [vmem:[%s3 + $0x1c] sm:$0xf] %vm1508, %v1369
  %1517 = vst.msk [vmem:[%s3 + $0x20] sm:$0xf] %vm1508, %v1370
  %1518 = vst.msk [vmem:[%s3 + $0x24] sm:$0xf] %vm1508, %v1371
  %1519 = vst.msk [vmem:[%s3 + $0x28] sm:$0xf] %vm1508, %v1372
  %1520 = vst.msk [vmem:[%s3 + $0x2c] sm:$0xf] %vm1508, %v1373
  %1521 = vst.msk [vmem:[%s3 + $0x30] sm:$0xf] %vm1508, %v1374
  %1522 = vst.msk [vmem:[%s3 + $0x34] sm:$0xf] %vm1508, %v1375
  %1523 = vst.msk [vmem:[%s3 + $0x38] sm:$0xf] %vm1508, %v1376
  %1524 = vst.msk [vmem:[%s3 + $0x3c] sm:$0xf] %vm1508, %v1377
  %1525 = vst.msk [vmem:[%s3 + $0x40] sm:$0xf] %vm1508, %v1378
  %1526 = vst.msk [vmem:[%s3 + $0x44] sm:$0xf] %vm1508, %v1379
  %1527 = vst.msk [vmem:[%s3 + $0x48] sm:$0xf] %vm1508, %v1380
  %1528 = vst.msk [vmem:[%s3 + $0x4c] sm:$0xf] %vm1508, %v1381
  %1529 = vst.msk [vmem:[%s3 + $0x50] sm:$0xf] %vm1508, %v1382
  %1530 = vst.msk [vmem:[%s3 + $0x54] sm:$0xf] %vm1508, %v1383
  %1531 = vst.msk [vmem:[%s3 + $0x58] sm:$0xf] %vm1508, %v1384
  %1532 = vst.msk [vmem:[%s3 + $0x5c] sm:$0xf] %vm1508, %v1385
  %1533 = vst.msk [vmem:[%s3 + $0x60] sm:$0xf] %vm1508, %v1386
  %1534 = vst.msk [vmem:[%s3 + $0x64] sm:$0xf] %vm1508, %v1387
  %1535 = vst.msk [vmem:[%s3 + $0x68] sm:$0xf] %vm1508, %v1388
  %1536 = vst.msk [vmem:[%s3 + $0x6c] sm:$0xf] %vm1508, %v1389
  %1537 = vst.msk [vmem:[%s3 + $0x70] sm:$0xf] %vm1508, %v1390
  %1538 = vst.msk [vmem:[%s3 + $0x74] sm:$0xf] %vm1508, %v1391
  %1539 = vst.msk [vmem:[%s3 + $0x78] sm:$0xf] %vm1508, %v1392
  %1540 = vst.msk [vmem:[%s3 + $0x7c] sm:$0xf] %vm1508, %v1393
  %1541 = vst.msk [vmem:[%s3 + $0x80] sm:$0xf] %vm1508, %v1394
  %1542 = vst.msk [vmem:[%s3 + $0x84] sm:$0xf] %vm1508, %v1395
  %1543 = vst.msk [vmem:[%s3 + $0x88] sm:$0xf] %vm1508, %v1396
  %1544 = vst.msk [vmem:[%s3 + $0x8c] sm:$0xf] %vm1508, %v1397
  %1545 = vst.msk [vmem:[%s3 + $0x90] sm:$0xf] %vm1508, %v1398
  %1546 = vst.msk [vmem:[%s3 + $0x94] sm:$0xf] %vm1508, %v1399
  %1547 = vst.msk [vmem:[%s3 + $0x98] sm:$0xf] %vm1508, %v1400
  %1548 = vst.msk [vmem:[%s3 + $0x9c] sm:$0xf] %vm1508, %v1401
  %1549 = vst.msk [vmem:[%s3 + $0xa0] sm:$0xf] %vm1508, %v1402
  %1550 = vst.msk [vmem:[%s3 + $0xa4] sm:$0xf] %vm1508, %v1403
  %1551 = vst.msk [vmem:[%s3 + $0xa8] sm:$0xf] %vm1508, %v1404
  %1552 = vst.msk [vmem:[%s3 + $0xac] sm:$0xf] %vm1508, %v1405
  %1553 = vst.msk [vmem:[%s3 + $0xb0] sm:$0xf] %vm1508, %v1406
  %1554 = vst.msk [vmem:[%s3 + $0xb4] sm:$0xf] %vm1508, %v1407
  %1555 = vst.msk [vmem:[%s3 + $0xb8] sm:$0xf] %vm1508, %v1408
  %1556 = vst.msk [vmem:[%s3 + $0xbc] sm:$0xf] %vm1508, %v1409
  %1557 = vst.msk [vmem:[%s3 + $0xc0] sm:$0xf] %vm1508, %v1410
  %1558 = vst.msk [vmem:[%s3 + $0xc4] sm:$0xf] %vm1508, %v1411
  %1559 = vst.msk [vmem:[%s3 + $0xc8] sm:$0xf] %vm1508, %v1412
  %1560 = vst.msk [vmem:[%s3 + $0xcc] sm:$0xf] %vm1508, %v1413
  %1561 = vst.msk [vmem:[%s3 + $0xd0] sm:$0xf] %vm1508, %v1414
  %1562 = vst.msk [vmem:[%s3 + $0xd4] sm:$0xf] %vm1508, %v1415
  %1563 = vst.msk [vmem:[%s3 + $0xd8] sm:$0xf] %vm1508, %v1416
  %1564 = vst.msk [vmem:[%s3 + $0xdc] sm:$0xf] %vm1508, %v1417
  %1565 = vst.msk [vmem:[%s3 + $0xe0] sm:$0xf] %vm1508, %v1418
  %1566 = vst.msk [vmem:[%s3 + $0xe4] sm:$0xf] %vm1508, %v1419
  %1567 = vst.msk [vmem:[%s3 + $0xe8] sm:$0xf] %vm1508, %v1420
  %1568 = vst.msk [vmem:[%s3 + $0xec] sm:$0xf] %vm1508, %v1421
  %1569 = vst.msk [vmem:[%s3 + $0xf0] sm:$0xf] %vm1508, %v1422
  %1570 = vst.msk [vmem:[%s3 + $0xf4] sm:$0xf] %vm1508, %v1423
  %1571 = vst.msk [vmem:[%s3 + $0xf8] sm:$0xf] %vm1508, %v1424
  %1572 = vst.msk [vmem:[%s3 + $0xfc] sm:$0xf] %vm1508, %v1425
  %1573 = vst.msk [vmem:[%s3 + $0x100] sm:$0xf] %vm1508, %v1426
  %1574 = vst.msk [vmem:[%s3 + $0x104] sm:$0xf] %vm1508, %v1427
  %1575 = vst.msk [vmem:[%s3 + $0x108] sm:$0xf] %vm1508, %v1428
  %1576 = vst.msk [vmem:[%s3 + $0x10c] sm:$0xf] %vm1508, %v1429
  %1577 = vst.msk [vmem:[%s3 + $0x110] sm:$0xf] %vm1508, %v1430
  %1578 = vst.msk [vmem:[%s3 + $0x114] sm:$0xf] %vm1508, %v1431
  %1579 = vst.msk [vmem:[%s3 + $0x118] sm:$0xf] %vm1508, %v1432
  %1580 = vst.msk [vmem:[%s3 + $0x11c] sm:$0xf] %vm1508, %v1433
  %vm1581 = vcmask 253952
  %1582 = vst.msk [vmem:[%s3 + $0x120] sm:$0x1] %vm1581, %v1434
  // Predicated region
  $region14: #{tpu_custom_call.1} parent=0 // pred_check
    _
  $region15: #{tpu_custom_call.1} parent=0 // pred_check_branch
    %1584 = sbr.rel (0) target = $region17
  $region16: #{tpu_custom_call.1} parent=0 // pred_region
    _
  $region17: #{tpu_custom_call.1} parent=0 // pred_fallthru
    _
  // Predicated region
  $region18: #{tpu_custom_call.1} parent=0 // pred_check
    _
  $region19: #{tpu_custom_call.1} parent=0 // pred_check_branch
    %1586 = sbr.rel (0) target = $region21
  $region20: #{tpu_custom_call.1} parent=0 // pred_region
    _
  $region21: #{tpu_custom_call.1} parent=0 // pred_fallthru
    _

</llo_original>
